<compile_context>
chip_gen: v5e
topology: v5e:2x2
jax: 0.10.0
libtpu: 0.0.40
codegen_flags: <defaults>
</compile_context>

<pallas_src>
import functools

import jax
import jax.numpy as jnp
from jax import lax
from jax.experimental import pallas as pl
from jax.experimental.pallas import tpu as pltpu

_F32 = jnp.float32
_BF16 = jnp.bfloat16
_LANE = 128
# Above the default scoped VMEM limit on v5e/v6e/v7x, below v7x's 64 MiB physical.
_VMEM_LIMIT = 48 * 1024 * 1024


# -----------------------------------------------------------------------------
# Small helpers
# -----------------------------------------------------------------------------
def _round_up(x, m):
    return -(-x // m) * m


def _pad2d(x, rows, cols):
    pr, pc = rows - x.shape[0], cols - x.shape[1]
    if pr == 0 and pc == 0:
        return x
    return jnp.pad(x, ((0, pr), (0, pc)))


def _pad_row(v, n):
    """1-D per-channel vector -> zero-padded (1, n) f32 row (lane-dense)."""
    return jnp.pad(v, (0, n - v.shape[0])).reshape(1, n).astype(_F32)


# -----------------------------------------------------------------------------
# Pallas kernels
# -----------------------------------------------------------------------------
def _conv_bn_relu_kernel(x_ref, w_ref, scale_ref, shift_ref, o_ref, acc_ref):
    # Grid = (M tiles ["parallel"], K tiles ["arbitrary" reduction]).
    # acc = sum_k x_k @ w_k ; y = relu(acc * scale + shift)
    k = pl.program_id(1)

    @pl.when(k == 0)
    def _():
        acc_ref[...] = jnp.zeros_like(acc_ref)

    acc_ref[...] += jnp.dot(x_ref[...], w_ref[...], preferred_element_type=jnp.float32)

    @pl.when(k == pl.num_programs(1) - 1)
    def _():
        h = acc_ref[...] * scale_ref[...] + shift_ref[...]
        o_ref[...] = jnp.maximum(h, 0.0).astype(o_ref.dtype)


def _conv_bn_relu_proj_softmax_kernel(x_ref, w_ref, scale_ref, shift_ref, wp_ref,
                                      o_ref, acc_ref, *, p_valid):
    # Fused: conv1(3x3 via K-tiled matmul) + BN + ReLU + conv2(1x1) + Softmax(dim=1).
    # Only the softmax probabilities are written (h1 stays in VMEM).
    k = pl.program_id(1)

    @pl.when(k == 0)
    def _():
        acc_ref[...] = jnp.zeros_like(acc_ref)

    acc_ref[...] += jnp.dot(x_ref[...], w_ref[...], preferred_element_type=jnp.float32)

    @pl.when(k == pl.num_programs(1) - 1)
    def _():
        h = jnp.maximum(acc_ref[...] * scale_ref[...] + shift_ref[...], 0.0)
        logits = jnp.dot(h.astype(jnp.bfloat16), wp_ref[...],
                         preferred_element_type=jnp.float32)
        # Lane-padded output columns (>= p_valid) are masked out of the softmax.
        lane = lax.broadcasted_iota(jnp.int32, logits.shape, 1)
        logits = jnp.where(lane < p_valid, logits, jnp.float32(-1e30))
        m = jnp.max(logits, axis=-1, keepdims=True)
        e = jnp.exp(logits - m)
        denom = jnp.sum(e, axis=-1, keepdims=True)
        r = pl.reciprocal(denom, approx=True)        # EUP slot
        r = r * (2.0 - denom * r)                    # one Newton step -> ~f32-exact 1/denom
        o_ref[...] = (e * r).astype(o_ref.dtype)


def _reduce_fused_kernel(x_ref, w1_ref, scale_ref, shift_ref, w2_ref, b2_ref, o_ref):
    # h = relu((x @ w1) * scale + shift)      (conv1x1 + bias + BN folded + ReLU)
    # o = h @ w2 + b2                         (conv1x1 + bias)
    h = jnp.dot(x_ref[...], w1_ref[...], preferred_element_type=jnp.float32)
    h = jnp.maximum(h * scale_ref[...] + shift_ref[...], 0.0)
    y = jnp.dot(h.astype(jnp.bfloat16), w2_ref[...], preferred_element_type=jnp.float32)
    o_ref[...] = (y + b2_ref[...]).astype(o_ref.dtype)


# -----------------------------------------------------------------------------
# Pallas wrappers (row tiles, zero-padded M/K, bf16 inputs, lane-dense outputs)
# -----------------------------------------------------------------------------
def conv_bn_relu(x, w, scale, shift, *, tm=256, tk=512):
    """x: [M, K] ; w: [K, Cp] (Cp multiple of 128) -> [M, Cp] bf16."""
    assert tk % _LANE == 0
    M, K = x.shape
    Kw, Cp = w.shape
    assert K == Kw and Cp % _LANE == 0
    tm = min(tm, _round_up(M, 16))       # bf16 needs sublane tiles of 16
    Mp = _round_up(M, tm)
    if K <= tk:
        tk, Kp = K, K                    # single K step, full-K block
    else:
        Kp = _round_up(K, tk)
    xb = _pad2d(x.astype(_BF16), Mp, Kp)
    wb = _pad2d(w.astype(_BF16), Kp, Cp)
    out = pl.pallas_call(
        _conv_bn_relu_kernel,
        out_shape=jax.ShapeDtypeStruct((Mp, Cp), _BF16),
        grid=(Mp // tm, Kp // tk),
        in_specs=[
            pl.BlockSpec((tm, tk), lambda i, k: (i, k)),
            pl.BlockSpec((tk, Cp), lambda i, k: (k, 0)),
            pl.BlockSpec((1, Cp), lambda i, k: (0, 0)),
            pl.BlockSpec((1, Cp), lambda i, k: (0, 0)),
        ],
        out_specs=pl.BlockSpec((tm, Cp), lambda i, k: (i, 0)),
        scratch_shapes=[pltpu.VMEM((tm, Cp), _F32)],
        compiler_params=pltpu.CompilerParams(
            dimension_semantics=("parallel", "arbitrary"),
            vmem_limit_bytes=_VMEM_LIMIT),
    )(xb, wb, scale, shift)
    return out[:M]


def conv_bn_relu_softmax(x, w, scale, shift, wp, p_num, *, tm=256, tk=512):
    """x: [M, K] ; w: [K, Cp] ; wp: [Cp, Pp] -> softmax probabilities [M, p_num] f32."""
    assert tk % _LANE == 0
    M, K = x.shape
    Kw, Cp = w.shape
    Cpw, Pp = wp.shape
    assert K == Kw and Cp == Cpw and Cp % _LANE == 0 and Pp % _LANE == 0
    tm = min(tm, _round_up(M, 16))
    Mp = _round_up(M, tm)
    if K <= tk:
        tk, Kp = K, K
    else:
        Kp = _round_up(K, tk)
    xb = _pad2d(x.astype(_BF16), Mp, Kp)
    wb = _pad2d(w.astype(_BF16), Kp, Cp)
    kern = functools.partial(_conv_bn_relu_proj_softmax_kernel, p_valid=p_num)
    out = pl.pallas_call(
        kern,
        out_shape=jax.ShapeDtypeStruct((Mp, Pp), _F32),
        grid=(Mp // tm, Kp // tk),
        in_specs=[
            pl.BlockSpec((tm, tk), lambda i, k: (i, k)),
            pl.BlockSpec((tk, Cp), lambda i, k: (k, 0)),
            pl.BlockSpec((1, Cp), lambda i, k: (0, 0)),
            pl.BlockSpec((1, Cp), lambda i, k: (0, 0)),
            pl.BlockSpec((Cp, Pp), lambda i, k: (0, 0)),
        ],
        out_specs=pl.BlockSpec((tm, Pp), lambda i, k: (i, 0)),
        scratch_shapes=[pltpu.VMEM((tm, Cp), _F32)],
        compiler_params=pltpu.CompilerParams(
            dimension_semantics=("parallel", "arbitrary"),
            vmem_limit_bytes=_VMEM_LIMIT),
    )(xb, wb, scale, shift, wp.astype(_BF16))
    return out[:M, :p_num]


def reduce_fused(x, w1, scale, shift, w2, b2, out_c, *, tm=256):
    """x: [M, C] ; w1: [C, midp] ; w2: [midp, outp] -> [M, out_c] f32."""
    M, K = x.shape
    Kw, midp = w1.shape
    midw, outp = w2.shape
    assert K == Kw and midp == midw and midp % _LANE == 0 and outp % _LANE == 0
    tm = min(tm, _round_up(M, 16))
    Mp = _round_up(M, tm)
    xb = _pad2d(x.astype(_BF16), Mp, K)
    out = pl.pallas_call(
        _reduce_fused_kernel,
        out_shape=jax.ShapeDtypeStruct((Mp, outp), _F32),
        grid=(Mp // tm,),
        in_specs=[
            pl.BlockSpec((tm, K), lambda i: (i, 0)),
            pl.BlockSpec((K, midp), lambda i: (0, 0)),
            pl.BlockSpec((1, midp), lambda i: (0, 0)),
            pl.BlockSpec((1, midp), lambda i: (0, 0)),
            pl.BlockSpec((midp, outp), lambda i: (0, 0)),
            pl.BlockSpec((1, outp), lambda i: (0, 0)),
        ],
        out_specs=pl.BlockSpec((tm, outp), lambda i: (i, 0)),
        compiler_params=pltpu.CompilerParams(
            dimension_semantics=("parallel",),
            vmem_limit_bytes=_VMEM_LIMIT),
    )(xb, w1.astype(_BF16), scale, shift, w2.astype(_BF16), b2)
    return out[:M, :out_c]


# -----------------------------------------------------------------------------
# Plain-JAX glue
# -----------------------------------------------------------------------------
# TODO(synk): replace the XLA im2col with in-kernel 9-tap/halo streaming (tap-reduction
# over the padded NHWC block) to avoid the 9x activation copy through HBM; at this
# module's tiny deepest-level spatial sizes (<= 7x7) the copy is small, so it is kept
# in XLA (in bf16, half the previous traffic) to keep the Pallas lowering simple.
def im2col_3x3(x_nhwc):
    """3x3, pad=1 neighborhoods -> [N*H*W, 9*C], column order (dh, dw, c)."""
    N, H, W, C = x_nhwc.shape
    xp = jnp.pad(x_nhwc, ((0, 0), (1, 1), (1, 1), (0, 0)))
    cols = [xp[:, dh:dh + H, dw:dw + W, :] for dh in range(3) for dw in range(3)]
    return jnp.concatenate(cols, axis=-1).reshape(N * H * W, 9 * C)


def conv3x3_weight_to_mat(w_oihw, cin_pad, cout_pad):
    """PyTorch conv weight [Cout, Cin, 3, 3] -> matmul weight [9*cin_pad, cout_pad]
    matching the im2col (dh, dw, cin) column order; padded dims are zero-filled."""
    cout, cin = w_oihw.shape[0], w_oihw.shape[1]
    w = jnp.transpose(w_oihw, (2, 3, 1, 0))                  # (3, 3, cin, cout)
    w = jnp.pad(w, ((0, 0), (0, 0), (0, cin_pad - cin), (0, cout_pad - cout)))
    return w.reshape(9 * cin_pad, cout_pad)


def conv1x1_weight_to_mat(w_oi11, cin_pad, cout_pad):
    cout, cin = w_oi11.shape[0], w_oi11.shape[1]
    w = jnp.transpose(w_oi11[:, :, 0, 0], (1, 0))            # (cin, cout)
    return jnp.pad(w, ((0, cin_pad - cin), (0, cout_pad - cout)))


def bn_fold(gamma, beta, mean, var, conv_bias=None, eps=1e-5):
    scale = gamma / jnp.sqrt(var + eps)
    bias = conv_bias if conv_bias is not None else 0.0
    shift = (bias - mean) * scale + beta
    return scale, shift


def standin_encoder(x_nchw, enc_ws):
    # TODO(synk): self.glconv is a ResNet-50 encoder from segmentation_models_pytorch;
    # full backbone is out of scope, replaced by a deterministic 2x-avgpool + 1x1-proj
    # stand-in producing the same 6-level feature-pyramid structure.
    feats = [x_nchw]
    cur = x_nchw
    for w in enc_ws:
        N, C, H, W = cur.shape
        cur = cur.reshape(N, C, H // 2, 2, W // 2, 2).mean(axis=(3, 5))
        cur = jax.nn.relu(jnp.einsum('nchw,cd->ndhw', cur, w))
        feats.append(cur)
    return feats


# -----------------------------------------------------------------------------
# GlobalAttConv forward
# -----------------------------------------------------------------------------
@functools.partial(jax.jit, static_argnames=("p_num", "out_c"))
def global_att_conv_forward(x_image, params, p_num, out_c):
    feats = standin_encoder(x_image, params['enc_ws'])
    f = feats[-1]                                    # [N, in_chans, H, W]
    N, C, H, W = f.shape
    mid_p = params['w0_mat'].shape[1]                # lane-padded mid channels
    M = N * H * W

    f_rows = jnp.transpose(f, (0, 2, 3, 1)).astype(_BF16)        # NHWC, bf16

    # ---- attn_head ----
    x0 = im2col_3x3(f_rows)                                               # [M, 9*Cin]
    h0 = conv_bn_relu(x0, params['w0_mat'], params['s0'], params['sh0'])  # [M, mid_p] bf16
    x1 = im2col_3x3(h0.reshape(N, H, W, mid_p))                           # [M, 9*mid_p]
    att_rows = conv_bn_relu_softmax(x1, params['w1_mat'], params['s1'], params['sh1'],
                                    params['wp_mat'], p_num)              # [M, P] f32
    att = jnp.transpose(att_rows.reshape(N, H, W, p_num), (0, 3, 1, 2))   # NCHW

    # ---- chans_reduce (reduce_chans == True for the resnet branch) ----
    rows = f_rows.reshape(M, C)
    red_rows = reduce_fused(rows, params['w_r1_mat'], params['s_r'], params['sh_r'],
                            params['w_r2_mat'], params['b_r2'], out_c)    # [M, out_c] f32
    red = jnp.transpose(red_rows.reshape(N, H, W, out_c), (0, 3, 1, 2))   # NCHW
    feats[-1] = red

    return att, feats


# -----------------------------------------------------------------------------
# Deterministic parameter init (scaled-down version of in=2048, mid=512, out=96)
# -----------------------------------------------------------------------------
def init_params(key, in_chans=128, mid_chans=64, patch_numbers=4, out_chans=32):
    ks = iter(jax.random.split(key, 32))
    nrm = lambda shape, s=0.05: (s * jax.random.normal(next(ks), shape)).astype(_F32)

    # stand-in encoder 1x1 projections: 3 -> 8 -> 16 -> 32 -> 64 -> in_chans
    enc_chans = [3, 8, 16, 32, 64, in_chans]
    enc_ws = [nrm((enc_chans[i], enc_chans[i + 1]), 0.2) for i in range(5)]

    def bn_params(c, k):
        kk = jax.random.split(k, 4)
        gamma = 1.0 + 0.1 * jax.random.normal(kk[0], (c,))
        beta = 0.1 * jax.random.normal(kk[1], (c,))
        mean = 0.1 * jax.random.normal(kk[2], (c,))
        var = 1.0 + 0.1 * jnp.abs(jax.random.normal(kk[3], (c,)))
        return (gamma.astype(_F32), beta.astype(_F32),
                mean.astype(_F32), var.astype(_F32))

    mid_p = _round_up(mid_chans, _LANE)
    p_p = _round_up(patch_numbers, _LANE)
    out_p = _round_up(out_chans, _LANE)

    # attn_head: conv0(3x3, no bias) + bn0 + relu
    w0 = nrm((mid_chans, in_chans, 3, 3))
    s0, sh0 = bn_fold(*bn_params(mid_chans, next(ks)))
    # conv1(3x3, no bias) + bn1 + relu   (DPATCH_INNER_3x3=True; input carries
    # mid_p lane-padded channels from conv0, padded weight rows are zero)
    w1 = nrm((mid_chans, mid_chans, 3, 3))
    s1, sh1 = bn_fold(*bn_params(mid_chans, next(ks)))
    # conv2(1x1, no bias) + softmax(dim=1)
    wp = nrm((patch_numbers, mid_chans, 1, 1))

    # chans_reduce: conv1x1(+bias) + bn + relu + conv1x1(+bias)
    w_r1 = nrm((mid_chans, in_chans, 1, 1))
    b_r1 = nrm((mid_chans,))
    g_r, be_r, m_r, v_r = bn_params(mid_chans, next(ks))
    s_r, sh_r = bn_fold(g_r, be_r, m_r, v_r, conv_bias=b_r1)
    w_r2 = nrm((out_chans, mid_chans, 1, 1))
    b_r2 = nrm((out_chans,))

    return {
        'enc_ws': enc_ws,
        # padded, matmul-ready layouts (all lane dims are multiples of 128)
        'w0_mat': conv3x3_weight_to_mat(w0, cin_pad=in_chans, cout_pad=mid_p),
        's0': _pad_row(s0, mid_p), 'sh0': _pad_row(sh0, mid_p),
        'w1_mat': conv3x3_weight_to_mat(w1, cin_pad=mid_p, cout_pad=mid_p),
        's1': _pad_row(s1, mid_p), 'sh1': _pad_row(sh1, mid_p),
        'wp_mat': conv1x1_weight_to_mat(wp, cin_pad=mid_p, cout_pad=p_p),
        'w_r1_mat': conv1x1_weight_to_mat(w_r1, cin_pad=in_chans, cout_pad=mid_p),
        's_r': _pad_row(s_r, mid_p), 'sh_r': _pad_row(sh_r, mid_p),
        'w_r2_mat': conv1x1_weight_to_mat(w_r2, cin_pad=mid_p, cout_pad=out_p),
        'b_r2': _pad_row(b_r2, out_p),
    }


# -----------------------------------------------------------------------------
if __name__ == "__main__":
    key = jax.random.PRNGKey(0)
    k_img, k_par = jax.random.split(key)

    # small image; depth-5 stand-in encoder -> deepest feature [2, 128, 4, 4]
    x = jax.random.normal(k_img, (2, 3, 128, 128), dtype=jnp.float32)
    params = init_params(k_par)

    att, feats = global_att_conv_forward(x, params, p_num=4, out_c=32)
    jax.block_until_ready(att)
    jax.block_until_ready(feats[-1])

    assert att.shape == (2, 4, 4, 4)          # (N, patch_numbers, H/32, W/32)
    assert feats[-1].shape == (2, 32, 4, 4)   # (N, out_chans, H/32, W/32)
    # softmax over the channel dim sums to 1 and is non-negative
    assert bool(jnp.allclose(att.sum(axis=1), 1.0, atol=1e-4))
    assert bool(jnp.all(att >= 0.0))

    print("KERNEL_OK")
</pallas_src>

<mosaic_0001>
module attributes {stable_mosaic.version = 11 : i64} {
  func.func @_conv_bn_relu_kernel(%arg0: i32, %arg1: i32, %arg2: memref<32x512xbf16, #tpu.memory_space<vmem>>, %arg3: memref<512x128xbf16, #tpu.memory_space<vmem>>, %arg4: memref<1x128xf32, #tpu.memory_space<vmem>>, %arg5: memref<1x128xf32, #tpu.memory_space<vmem>>, %arg6: memref<32x128xbf16, #tpu.memory_space<vmem>>, %arg7: memref<32x128xf32, #tpu.memory_space<vmem>>) attributes {dimension_semantics = [#tpu.dimension_semantics<parallel>, #tpu.dimension_semantics<arbitrary>], iteration_bounds = array<i64: 1, 3>, scalar_prefetch = 0 : i64, scratch_operands = 1 : i64, tpu.core_type = #tpu.core_type<tc>, window_params = [{transform_indices = @transform_0, window_bounds = array<i64: 32, 512>}, {transform_indices = @transform_1, window_bounds = array<i64: 512, 128>}, {pipeline_mode = #tpu.pipeline_mode<synchronous>, transform_indices = @transform_2, window_bounds = array<i64: 1, 128>}, {pipeline_mode = #tpu.pipeline_mode<synchronous>, transform_indices = @transform_3, window_bounds = array<i64: 1, 128>}, {transform_indices = @transform_4, window_bounds = array<i64: 32, 128>}]} {
    %c0_i32 = arith.constant 0 : i32
    %0 = arith.cmpi eq, %arg1, %c0_i32 : i32
    %1 = arith.extui %0 : i1 to i32
    %c0_i32_0 = arith.constant 0 : i32
    %2 = arith.cmpi ne, %1, %c0_i32_0 : i32
    scf.if %2 {
      %cst_9 = arith.constant 0.000000e+00 : f32
      %12 = vector.broadcast %cst_9 : f32 to vector<32x128xf32>
      %c0_10 = arith.constant 0 : index
      %c0_11 = arith.constant 0 : index
      %13 = vector.load %arg7[%c0_10, %c0_11] : memref<32x128xf32, #tpu.memory_space<vmem>>, vector<32x128xf32>
      tpu.vector_store %arg7[%c0_10, %c0_11], %12 {strides = array<i32>} : memref<32x128xf32, #tpu.memory_space<vmem>>, vector<32x128xf32>,
    } else {
    }
    %c0 = arith.constant 0 : index
    %c0_1 = arith.constant 0 : index
    %3 = vector.load %arg7[%c0, %c0_1] : memref<32x128xf32, #tpu.memory_space<vmem>>, vector<32x128xf32>
    %c0_2 = arith.constant 0 : index
    %c0_3 = arith.constant 0 : index
    %4 = vector.load %arg2[%c0_2, %c0_3] : memref<32x512xbf16, #tpu.memory_space<vmem>>, vector<32x512xbf16>
    %c0_4 = arith.constant 0 : index
    %c0_5 = arith.constant 0 : index
    %5 = vector.load %arg3[%c0_4, %c0_5] : memref<512x128xbf16, #tpu.memory_space<vmem>>, vector<512x128xbf16>
    %cst = arith.constant dense<0.000000e+00> : vector<32x128xf32>
    %6 = tpu.matmul %4, %5, %cst {dimension_numbers = #tpu.dot_dimension_numbers<[1], [0], [0], [1], [0, 0, 1, 1], [], []>} : vector<32x512xbf16>, vector<512x128xbf16>, vector<32x128xf32> -> vector<32x128xf32>
    %7 = arith.addf %3, %6 : vector<32x128xf32>
    %c0_6 = arith.constant 0 : index
    %c0_7 = arith.constant 0 : index
    %8 = vector.load %arg7[%c0_6, %c0_7] : memref<32x128xf32, #tpu.memory_space<vmem>>, vector<32x128xf32>
    tpu.vector_store %arg7[%c0_6, %c0_7], %7 {strides = array<i32>} : memref<32x128xf32, #tpu.memory_space<vmem>>, vector<32x128xf32>,
    %c2_i32 = arith.constant 2 : i32
    %9 = arith.cmpi eq, %arg1, %c2_i32 : i32
    %10 = arith.extui %9 : i1 to i32
    %c0_i32_8 = arith.constant 0 : i32
    %11 = arith.cmpi ne, %10, %c0_i32_8 : i32
    scf.if %11 {
      %c0_9 = arith.constant 0 : index
      %c0_10 = arith.constant 0 : index
      %12 = vector.load %arg7[%c0_9, %c0_10] : memref<32x128xf32, #tpu.memory_space<vmem>>, vector<32x128xf32>
      %c0_11 = arith.constant 0 : index
      %c0_12 = arith.constant 0 : index
      %13 = vector.load %arg4[%c0_11, %c0_12] : memref<1x128xf32, #tpu.memory_space<vmem>>, vector<1x128xf32>
      %14 = vector.broadcast %13 : vector<1x128xf32> to vector<32x128xf32>
      %15 = arith.mulf %12, %14 : vector<32x128xf32>
      %c0_13 = arith.constant 0 : index
      %c0_14 = arith.constant 0 : index
      %16 = vector.load %arg5[%c0_13, %c0_14] : memref<1x128xf32, #tpu.memory_space<vmem>>, vector<1x128xf32>
      %17 = vector.broadcast %16 : vector<1x128xf32> to vector<32x128xf32>
      %18 = arith.addf %15, %17 : vector<32x128xf32>
      %cst_15 = arith.constant 0.000000e+00 : f32
      %19 = vector.broadcast %cst_15 : f32 to vector<32x128xf32>
      %20 = arith.maximumf %18, %19 : vector<32x128xf32>
      %21 = arith.truncf %20 : vector<32x128xf32> to vector<32x128xbf16>
      %c0_16 = arith.constant 0 : index
      %c0_17 = arith.constant 0 : index
      %22 = vector.load %arg6[%c0_16, %c0_17] : memref<32x128xbf16, #tpu.memory_space<vmem>>, vector<32x128xbf16>
      tpu.vector_store %arg6[%c0_16, %c0_17], %21 {strides = array<i32>} : memref<32x128xbf16, #tpu.memory_space<vmem>>, vector<32x128xbf16>,
    } else {
    }
    return
  }
  func.func @transform_0(%arg0: i32, %arg1: i32) -> (i32, i32) {
    %c0_i32 = arith.constant 0 : i32
    return %arg0, %arg1 : i32, i32
  }
  func.func @transform_1(%arg0: i32, %arg1: i32) -> (i32, i32) {
    %c0_i32 = arith.constant 0 : i32
    %c0_i32_0 = arith.constant 0 : i32
    return %arg1, %c0_i32 : i32, i32
  }
  func.func @transform_2(%arg0: i32, %arg1: i32) -> (i32, i32) {
    %c0_i32 = arith.constant 0 : i32
    %c0_i32_0 = arith.constant 0 : i32
    %c0_i32_1 = arith.constant 0 : i32
    return %c0_i32, %c0_i32_0 : i32, i32
  }
  func.func @transform_3(%arg0: i32, %arg1: i32) -> (i32, i32) {
    %c0_i32 = arith.constant 0 : i32
    %c0_i32_0 = arith.constant 0 : i32
    %c0_i32_1 = arith.constant 0 : i32
    return %c0_i32, %c0_i32_0 : i32, i32
  }
  func.func @transform_4(%arg0: i32, %arg1: i32) -> (i32, i32) {
    %c0_i32 = arith.constant 0 : i32
    %c0_i32_0 = arith.constant 0 : i32
    return %arg0, %c0_i32 : i32, i32
  }
}

module attributes {stable_mosaic.version = 11 : i64} {
  func.func @_conv_bn_relu_proj_softmax_kernel(%arg0: i32, %arg1: i32, %arg2: memref<32x512xbf16, #tpu.memory_space<vmem>>, %arg3: memref<512x128xbf16, #tpu.memory_space<vmem>>, %arg4: memref<1x128xf32, #tpu.memory_space<vmem>>, %arg5: memref<1x128xf32, #tpu.memory_space<vmem>>, %arg6: memref<128x128xbf16, #tpu.memory_space<vmem>>, %arg7: memref<32x128xf32, #tpu.memory_space<vmem>>, %arg8: memref<32x128xf32, #tpu.memory_space<vmem>>) attributes {dimension_semantics = [#tpu.dimension_semantics<parallel>, #tpu.dimension_semantics<arbitrary>], iteration_bounds = array<i64: 1, 3>, scalar_prefetch = 0 : i64, scratch_operands = 1 : i64, tpu.core_type = #tpu.core_type<tc>, window_params = [{transform_indices = @transform_0, window_bounds = array<i64: 32, 512>}, {transform_indices = @transform_1, window_bounds = array<i64: 512, 128>}, {pipeline_mode = #tpu.pipeline_mode<synchronous>, transform_indices = @transform_2, window_bounds = array<i64: 1, 128>}, {pipeline_mode = #tpu.pipeline_mode<synchronous>, transform_indices = @transform_3, window_bounds = array<i64: 1, 128>}, {pipeline_mode = #tpu.pipeline_mode<synchronous>, transform_indices = @transform_4, window_bounds = array<i64: 128, 128>}, {transform_indices = @transform_5, window_bounds = array<i64: 32, 128>}]} {
    %c0_i32 = arith.constant 0 : i32
    %0 = arith.cmpi eq, %arg1, %c0_i32 : i32
    %1 = arith.extui %0 : i1 to i32
    %c0_i32_0 = arith.constant 0 : i32
    %2 = arith.cmpi ne, %1, %c0_i32_0 : i32
    scf.if %2 {
      %cst_9 = arith.constant 0.000000e+00 : f32
      %12 = vector.broadcast %cst_9 : f32 to vector<32x128xf32>
      %c0_10 = arith.constant 0 : index
      %c0_11 = arith.constant 0 : index
      %13 = vector.load %arg8[%c0_10, %c0_11] : memref<32x128xf32, #tpu.memory_space<vmem>>, vector<32x128xf32>
      tpu.vector_store %arg8[%c0_10, %c0_11], %12 {strides = array<i32>} : memref<32x128xf32, #tpu.memory_space<vmem>>, vector<32x128xf32>,
    } else {
    }
    %c0 = arith.constant 0 : index
    %c0_1 = arith.constant 0 : index
    %3 = vector.load %arg8[%c0, %c0_1] : memref<32x128xf32, #tpu.memory_space<vmem>>, vector<32x128xf32>
    %c0_2 = arith.constant 0 : index
    %c0_3 = arith.constant 0 : index
    %4 = vector.load %arg2[%c0_2, %c0_3] : memref<32x512xbf16, #tpu.memory_space<vmem>>, vector<32x512xbf16>
    %c0_4 = arith.constant 0 : index
    %c0_5 = arith.constant 0 : index
    %5 = vector.load %arg3[%c0_4, %c0_5] : memref<512x128xbf16, #tpu.memory_space<vmem>>, vector<512x128xbf16>
    %cst = arith.constant dense<0.000000e+00> : vector<32x128xf32>
    %6 = tpu.matmul %4, %5, %cst {dimension_numbers = #tpu.dot_dimension_numbers<[1], [0], [0], [1], [0, 0, 1, 1], [], []>} : vector<32x512xbf16>, vector<512x128xbf16>, vector<32x128xf32> -> vector<32x128xf32>
    %7 = arith.addf %3, %6 : vector<32x128xf32>
    %c0_6 = arith.constant 0 : index
    %c0_7 = arith.constant 0 : index
    %8 = vector.load %arg8[%c0_6, %c0_7] : memref<32x128xf32, #tpu.memory_space<vmem>>, vector<32x128xf32>
    tpu.vector_store %arg8[%c0_6, %c0_7], %7 {strides = array<i32>} : memref<32x128xf32, #tpu.memory_space<vmem>>, vector<32x128xf32>,
    %c2_i32 = arith.constant 2 : i32
    %9 = arith.cmpi eq, %arg1, %c2_i32 : i32
    %10 = arith.extui %9 : i1 to i32
    %c0_i32_8 = arith.constant 0 : i32
    %11 = arith.cmpi ne, %10, %c0_i32_8 : i32
    scf.if %11 {
      %c0_9 = arith.constant 0 : index
      %c0_10 = arith.constant 0 : index
      %12 = vector.load %arg8[%c0_9, %c0_10] : memref<32x128xf32, #tpu.memory_space<vmem>>, vector<32x128xf32>
      %c0_11 = arith.constant 0 : index
      %c0_12 = arith.constant 0 : index
      %13 = vector.load %arg4[%c0_11, %c0_12] : memref<1x128xf32, #tpu.memory_space<vmem>>, vector<1x128xf32>
      %14 = vector.broadcast %13 : vector<1x128xf32> to vector<32x128xf32>
      %15 = arith.mulf %12, %14 : vector<32x128xf32>
      %c0_13 = arith.constant 0 : index
      %c0_14 = arith.constant 0 : index
      %16 = vector.load %arg5[%c0_13, %c0_14] : memref<1x128xf32, #tpu.memory_space<vmem>>, vector<1x128xf32>
      %17 = vector.broadcast %16 : vector<1x128xf32> to vector<32x128xf32>
      %18 = arith.addf %15, %17 : vector<32x128xf32>
      %cst_15 = arith.constant 0.000000e+00 : f32
      %19 = vector.broadcast %cst_15 : f32 to vector<32x128xf32>
      %20 = arith.maximumf %18, %19 : vector<32x128xf32>
      %21 = arith.truncf %20 : vector<32x128xf32> to vector<32x128xbf16>
      %c0_16 = arith.constant 0 : index
      %c0_17 = arith.constant 0 : index
      %22 = vector.load %arg6[%c0_16, %c0_17] : memref<128x128xbf16, #tpu.memory_space<vmem>>, vector<128x128xbf16>
      %cst_18 = arith.constant dense<0.000000e+00> : vector<32x128xf32>
      %23 = tpu.matmul %21, %22, %cst_18 {dimension_numbers = #tpu.dot_dimension_numbers<[1], [0], [0], [1], [0, 0, 1, 1], [], []>} : vector<32x128xbf16>, vector<128x128xbf16>, vector<32x128xf32> -> vector<32x128xf32>
      %24 = tpu.iota {dimensions = array<i32: 1>} : vector<32x128xi32>
      %c4_i32 = arith.constant 4 : i32
      %25 = vector.broadcast %c4_i32 : i32 to vector<32x128xi32>
      %26 = arith.cmpi slt, %24, %25 : vector<32x128xi32>
      %cst_19 = arith.constant -1.000000e+30 : f32
      %27 = vector.broadcast %cst_19 : f32 to vector<32x128xf32>
      %28 = arith.select %26, %23, %27 : vector<32x128xi1>, vector<32x128xf32>
      %cst_20 = arith.constant dense<0xFF800000> : vector<32xf32>
      %29 = vector.multi_reduction <maximumf>, %28, %cst_20 [1] : vector<32x128xf32> to vector<32xf32>
      %30 = vector.shape_cast %29 : vector<32xf32> to vector<32x1xf32>
      %31 = vector.broadcast %30 : vector<32x1xf32> to vector<32x128xf32>
      %32 = arith.subf %28, %31 : vector<32x128xf32>
      %33 = math.exp %32 : vector<32x128xf32>
      %cst_21 = arith.constant dense<0.000000e+00> : vector<32xf32>
      %34 = vector.multi_reduction <add>, %33, %cst_21 [1] : vector<32x128xf32> to vector<32xf32>
      %35 = vector.shape_cast %34 : vector<32xf32> to vector<32x1xf32>
      %36 = tpu.reciprocal %35 {approx = true} : vector<32x1xf32> -> vector<32x1xf32>
      %37 = arith.mulf %35, %36 : vector<32x1xf32>
      %cst_22 = arith.constant 2.000000e+00 : f32
      %38 = vector.broadcast %cst_22 : f32 to vector<32x1xf32>
      %39 = arith.subf %38, %37 : vector<32x1xf32>
      %40 = arith.mulf %36, %39 : vector<32x1xf32>
      %41 = vector.broadcast %40 : vector<32x1xf32> to vector<32x128xf32>
      %42 = arith.mulf %33, %41 : vector<32x128xf32>
      %c0_23 = arith.constant 0 : index
      %c0_24 = arith.constant 0 : index
      %43 = vector.load %arg7[%c0_23, %c0_24] : memref<32x128xf32, #tpu.memory_space<vmem>>, vector<32x128xf32>
      tpu.vector_store %arg7[%c0_23, %c0_24], %42 {strides = array<i32>} : memref<32x128xf32, #tpu.memory_space<vmem>>, vector<32x128xf32>,
    } else {
    }
    return
  }
  func.func @transform_0(%arg0: i32, %arg1: i32) -> (i32, i32) {
    %c0_i32 = arith.constant 0 : i32
    return %arg0, %arg1 : i32, i32
  }
  func.func @transform_1(%arg0: i32, %arg1: i32) -> (i32, i32) {
    %c0_i32 = arith.constant 0 : i32
    %c0_i32_0 = arith.constant 0 : i32
    return %arg1, %c0_i32 : i32, i32
  }
  func.func @transform_2(%arg0: i32, %arg1: i32) -> (i32, i32) {
    %c0_i32 = arith.constant 0 : i32
    %c0_i32_0 = arith.constant 0 : i32
    %c0_i32_1 = arith.constant 0 : i32
    return %c0_i32, %c0_i32_0 : i32, i32
  }
  func.func @transform_3(%arg0: i32, %arg1: i32) -> (i32, i32) {
    %c0_i32 = arith.constant 0 : i32
    %c0_i32_0 = arith.constant 0 : i32
    %c0_i32_1 = arith.constant 0 : i32
    return %c0_i32, %c0_i32_0 : i32, i32
  }
  func.func @transform_4(%arg0: i32, %arg1: i32) -> (i32, i32) {
    %c0_i32 = arith.constant 0 : i32
    %c0_i32_0 = arith.constant 0 : i32
    %c0_i32_1 = arith.constant 0 : i32
    return %c0_i32, %c0_i32_0 : i32, i32
  }
  func.func @transform_5(%arg0: i32, %arg1: i32) -> (i32, i32) {
    %c0_i32 = arith.constant 0 : i32
    %c0_i32_0 = arith.constant 0 : i32
    return %arg0, %c0_i32 : i32, i32
  }
}

module attributes {stable_mosaic.version = 11 : i64} {
  func.func @_reduce_fused_kernel(%arg0: i32, %arg1: memref<32x128xbf16, #tpu.memory_space<vmem>>, %arg2: memref<128x128xbf16, #tpu.memory_space<vmem>>, %arg3: memref<1x128xf32, #tpu.memory_space<vmem>>, %arg4: memref<1x128xf32, #tpu.memory_space<vmem>>, %arg5: memref<128x128xbf16, #tpu.memory_space<vmem>>, %arg6: memref<1x128xf32, #tpu.memory_space<vmem>>, %arg7: memref<32x128xf32, #tpu.memory_space<vmem>>) attributes {dimension_semantics = [#tpu.dimension_semantics<parallel>], iteration_bounds = array<i64: 1>, scalar_prefetch = 0 : i64, scratch_operands = 0 : i64, tpu.core_type = #tpu.core_type<tc>, window_params = [{transform_indices = @transform_0, window_bounds = array<i64: 32, 128>}, {pipeline_mode = #tpu.pipeline_mode<synchronous>, transform_indices = @transform_1, window_bounds = array<i64: 128, 128>}, {pipeline_mode = #tpu.pipeline_mode<synchronous>, transform_indices = @transform_2, window_bounds = array<i64: 1, 128>}, {pipeline_mode = #tpu.pipeline_mode<synchronous>, transform_indices = @transform_3, window_bounds = array<i64: 1, 128>}, {pipeline_mode = #tpu.pipeline_mode<synchronous>, transform_indices = @transform_4, window_bounds = array<i64: 128, 128>}, {pipeline_mode = #tpu.pipeline_mode<synchronous>, transform_indices = @transform_5, window_bounds = array<i64: 1, 128>}, {transform_indices = @transform_6, window_bounds = array<i64: 32, 128>}]} {
    %c0 = arith.constant 0 : index
    %c0_0 = arith.constant 0 : index
    %0 = vector.load %arg1[%c0, %c0_0] : memref<32x128xbf16, #tpu.memory_space<vmem>>, vector<32x128xbf16>
    %c0_1 = arith.constant 0 : index
    %c0_2 = arith.constant 0 : index
    %1 = vector.load %arg2[%c0_1, %c0_2] : memref<128x128xbf16, #tpu.memory_space<vmem>>, vector<128x128xbf16>
    %cst = arith.constant dense<0.000000e+00> : vector<32x128xf32>
    %2 = tpu.matmul %0, %1, %cst {dimension_numbers = #tpu.dot_dimension_numbers<[1], [0], [0], [1], [0, 0, 1, 1], [], []>} : vector<32x128xbf16>, vector<128x128xbf16>, vector<32x128xf32> -> vector<32x128xf32>
    %c0_3 = arith.constant 0 : index
    %c0_4 = arith.constant 0 : index
    %3 = vector.load %arg3[%c0_3, %c0_4] : memref<1x128xf32, #tpu.memory_space<vmem>>, vector<1x128xf32>
    %4 = vector.broadcast %3 : vector<1x128xf32> to vector<32x128xf32>
    %5 = arith.mulf %2, %4 : vector<32x128xf32>
    %c0_5 = arith.constant 0 : index
    %c0_6 = arith.constant 0 : index
    %6 = vector.load %arg4[%c0_5, %c0_6] : memref<1x128xf32, #tpu.memory_space<vmem>>, vector<1x128xf32>
    %7 = vector.broadcast %6 : vector<1x128xf32> to vector<32x128xf32>
    %8 = arith.addf %5, %7 : vector<32x128xf32>
    %cst_7 = arith.constant 0.000000e+00 : f32
    %9 = vector.broadcast %cst_7 : f32 to vector<32x128xf32>
    %10 = arith.maximumf %8, %9 : vector<32x128xf32>
    %11 = arith.truncf %10 : vector<32x128xf32> to vector<32x128xbf16>
    %c0_8 = arith.constant 0 : index
    %c0_9 = arith.constant 0 : index
    %12 = vector.load %arg5[%c0_8, %c0_9] : memref<128x128xbf16, #tpu.memory_space<vmem>>, vector<128x128xbf16>
    %cst_10 = arith.constant dense<0.000000e+00> : vector<32x128xf32>
    %13 = tpu.matmul %11, %12, %cst_10 {dimension_numbers = #tpu.dot_dimension_numbers<[1], [0], [0], [1], [0, 0, 1, 1], [], []>} : vector<32x128xbf16>, vector<128x128xbf16>, vector<32x128xf32> -> vector<32x128xf32>
    %c0_11 = arith.constant 0 : index
    %c0_12 = arith.constant 0 : index
    %14 = vector.load %arg6[%c0_11, %c0_12] : memref<1x128xf32, #tpu.memory_space<vmem>>, vector<1x128xf32>
    %15 = vector.broadcast %14 : vector<1x128xf32> to vector<32x128xf32>
    %16 = arith.addf %13, %15 : vector<32x128xf32>
    %c0_13 = arith.constant 0 : index
    %c0_14 = arith.constant 0 : index
    %17 = vector.load %arg7[%c0_13, %c0_14] : memref<32x128xf32, #tpu.memory_space<vmem>>, vector<32x128xf32>
    tpu.vector_store %arg7[%c0_13, %c0_14], %16 {strides = array<i32>} : memref<32x128xf32, #tpu.memory_space<vmem>>, vector<32x128xf32>,
    return
  }
  func.func @transform_0(%arg0: i32) -> (i32, i32) {
    %c0_i32 = arith.constant 0 : i32
    %c0_i32_0 = arith.constant 0 : i32
    return %arg0, %c0_i32 : i32, i32
  }
  func.func @transform_1(%arg0: i32) -> (i32, i32) {
    %c0_i32 = arith.constant 0 : i32
    %c0_i32_0 = arith.constant 0 : i32
    %c0_i32_1 = arith.constant 0 : i32
    return %c0_i32, %c0_i32_0 : i32, i32
  }
  func.func @transform_2(%arg0: i32) -> (i32, i32) {
    %c0_i32 = arith.constant 0 : i32
    %c0_i32_0 = arith.constant 0 : i32
    %c0_i32_1 = arith.constant 0 : i32
    return %c0_i32, %c0_i32_0 : i32, i32
  }
  func.func @transform_3(%arg0: i32) -> (i32, i32) {
    %c0_i32 = arith.constant 0 : i32
    %c0_i32_0 = arith.constant 0 : i32
    %c0_i32_1 = arith.constant 0 : i32
    return %c0_i32, %c0_i32_0 : i32, i32
  }
  func.func @transform_4(%arg0: i32) -> (i32, i32) {
    %c0_i32 = arith.constant 0 : i32
    %c0_i32_0 = arith.constant 0 : i32
    %c0_i32_1 = arith.constant 0 : i32
    return %c0_i32, %c0_i32_0 : i32, i32
  }
  func.func @transform_5(%arg0: i32) -> (i32, i32) {
    %c0_i32 = arith.constant 0 : i32
    %c0_i32_0 = arith.constant 0 : i32
    %c0_i32_1 = arith.constant 0 : i32
    return %c0_i32, %c0_i32_0 : i32, i32
  }
  func.func @transform_6(%arg0: i32) -> (i32, i32) {
    %c0_i32 = arith.constant 0 : i32
    %c0_i32_0 = arith.constant 0 : i32
    return %arg0, %c0_i32 : i32, i32
  }
}

</mosaic_0001>

<llo_original>
// kernel: global_att_conv_forward.3
$region0: #{global_att_conv_forward.3}
  #allocation0 [shape = 'u32[]', space=smem, size = 0x4, offset = 0x4, fixed_abs, tag = 'smem constant byte address 0x4 - core index']
  #allocation1 [shape = 'u32[72,128]{1,0:T(1,128)}', space=vmem, size = 0x9000, scoped, tag = 'internal scratch']
  #allocation2 [shape = 'f32[32,128]{1,0:T(8,128)}', space=vmem, size = 0x4000, scoped, tag = 'scratch operand']
  %s0 = inlined_call_operand.vmem [shape: bf16[32,1536], index: 0, kind: input, shape index: {}]
  %s1 = inlined_call_operand.vmem [shape: bf16[1536,128], index: 1, kind: input, shape index: {}]
  %s2 = inlined_call_operand.vmem [shape: f32[1,128], index: 2, kind: input, shape index: {}]
  %s3 = inlined_call_operand.vmem [shape: f32[1,128], index: 3, kind: input, shape index: {}]
  %s4 = inlined_call_operand.vmem [shape: bf16[32,128], index: 4, kind: output, shape index: {}]
  %s5 = sld [smem:[#allocation0]]
  $region80: #{global_att_conv_forward.3} parent=0
    _
  %s7 = ssub.s32 1, %s5
  %s8 = scalar_select 0, %s7, %s5
  $region1: #{global_att_conv_forward.3} parent=0
    #allocation3 [shape = 'u8[65536]{0}', space=vmem, size = 0x10000, scoped, tag = 'input window, operand 0']
    loop: start=0, step=1, limit=5
    $region2: #{global_att_conv_forward.3} parent=1 // loop_pre_header
      _
    $region3: #{global_att_conv_forward.3} parent=1 // loop_header
      %s10 = sphi 0, %s14
      %p11 = scmp.ge.s32.totalorder %s10, 5
      %s17 = sphi 0, %s29
      %s18 = sphi 0, %s25
      %s19 = sphi 0, %s17
      %s20 = sphi 0, %s18
      %s21 = sphi 0, %s19
      %s22 = sphi 0, %s20
      %s34 = sphi 0, %s36
      %s37 = sphi 0, %s34
      %s38 = sphi 0, %s37
      %s54 = sphi 0, %s38
      %s60 = sphi 0, %s62
      %s63 = sphi 0, %s60
      %s64 = sphi 0, %s63
      %s80 = sphi 0, %s64
      %s84 = sphi 0, %s84
      %s86 = sphi 0, %s84
      %s87 = sphi 0, %s86
      %s101 = sphi 0, %s87
      %s105 = sphi 0, %s105
      %s107 = sphi 0, %s105
      %s108 = sphi 0, %s107
      %s122 = sphi 0, %s108
      %s128 = sphi 0, %s130
      %s131 = sphi 0, %s128
      %s132 = sphi 0, %s131
      %s148 = sphi 0, %s132
    $region4: #{global_att_conv_forward.3} parent=1 // loop_header_branch
      %13 = sbr.rel (%p11) target = $region8
    $region5: #{global_att_conv_forward.3} parent=1 // loop_body
      %s15 = ssub.s32 %s10, 1
      %s16 = ssub.s32 %s10, 2
      %s23 = sadd.s32 1, %s18
      %p24 = scmp.ge.s32.totalorder %s23, 3
      %s25 = scalar_select %p24, 0, %s23
      %s26 = sadd.s32 1, %s17
      %s27 = scalar_select %p24, %s26, %s17
      %p28 = scmp.ge.s32.totalorder %s27, 1
      %s29 = scalar_select %p28, 0, %s27
      %s30 = ssub.s32 %s17, %s29
      %s31 = ssub.s32 %s18, %s25
      %s32 = sor.u32 %s30, %s31
      %p33 = scmp.eq.s32.totalorder %s32, 0
      %s35 = sadd.s32 %s34, 1
      %s36 = scalar_select %p33, %s34, %s35
      %p39 = pneg %p33
      %p40 = scmp.eq.s32.totalorder %s10, 2
      %p41 = por %p39, %p40
      %p42 = scmp.ne.s32.totalorder %s34, %s37
      %p43 = scmp.eq.s32.totalorder %s10, 0
      %p44 = por %p42, %p43
      %p45 = scmp.ne.s32.totalorder %s34, %s37
      %p46 = scmp.eq.s32.totalorder %s15, 2
      %p47 = por %p45, %p46
      %p48 = scmp.ne.s32.totalorder %s37, %s38
      %p49 = scmp.eq.s32.totalorder %s15, 0
      %p50 = por %p48, %p49
      %p51 = scmp.ne.s32.totalorder %s37, %s38
      %p52 = scmp.eq.s32.totalorder %s16, 2
      %p53 = por %p51, %p52
      %p55 = scmp.ne.s32.totalorder %s38, %s54
      %p56 = scmp.eq.s32.totalorder %s16, 0
      %p57 = por %p55, %p56
      %s58 = ssub.s32 %s18, %s25
      %p59 = scmp.eq.s32.totalorder %s58, 0
      %s61 = sadd.s32 %s60, 1
      %s62 = scalar_select %p59, %s60, %s61
      %p65 = pneg %p59
      %p66 = scmp.eq.s32.totalorder %s10, 2
      %p67 = por %p65, %p66
      %p68 = scmp.ne.s32.totalorder %s60, %s63
      %p69 = scmp.eq.s32.totalorder %s10, 0
      %p70 = por %p68, %p69
      %p71 = scmp.ne.s32.totalorder %s60, %s63
      %p72 = scmp.eq.s32.totalorder %s15, 2
      %p73 = por %p71, %p72
      %p74 = scmp.ne.s32.totalorder %s63, %s64
      %p75 = scmp.eq.s32.totalorder %s15, 0
      %p76 = por %p74, %p75
      %p77 = scmp.ne.s32.totalorder %s63, %s64
      %p78 = scmp.eq.s32.totalorder %s16, 2
      %p79 = por %p77, %p78
      %p81 = scmp.ne.s32.totalorder %s64, %s80
      %p82 = scmp.eq.s32.totalorder %s16, 0
      %p83 = por %p81, %p82
      %s85 = sadd.s32 %s84, 1
      %p88 = scmp.eq.s32.totalorder %s10, 2
      %p89 = scmp.ne.s32.totalorder %s84, %s86
      %p90 = scmp.eq.s32.totalorder %s10, 0
      %p91 = por %p89, %p90
      %p92 = scmp.ne.s32.totalorder %s84, %s86
      %p93 = scmp.eq.s32.totalorder %s15, 2
      %p94 = por %p92, %p93
      %p95 = scmp.ne.s32.totalorder %s86, %s87
      %p96 = scmp.eq.s32.totalorder %s15, 0
      %p97 = por %p95, %p96
      %p98 = scmp.ne.s32.totalorder %s86, %s87
      %p99 = scmp.eq.s32.totalorder %s16, 2
      %p100 = por %p98, %p99
      %p102 = scmp.ne.s32.totalorder %s87, %s101
      %p103 = scmp.eq.s32.totalorder %s16, 0
      %p104 = por %p102, %p103
      %s106 = sadd.s32 %s105, 1
      %p109 = scmp.eq.s32.totalorder %s10, 2
      %p110 = scmp.ne.s32.totalorder %s105, %s107
      %p111 = scmp.eq.s32.totalorder %s10, 0
      %p112 = por %p110, %p111
      %p113 = scmp.ne.s32.totalorder %s105, %s107
      %p114 = scmp.eq.s32.totalorder %s15, 2
      %p115 = por %p113, %p114
      %p116 = scmp.ne.s32.totalorder %s107, %s108
      %p117 = scmp.eq.s32.totalorder %s15, 0
      %p118 = por %p116, %p117
      %p119 = scmp.ne.s32.totalorder %s107, %s108
      %p120 = scmp.eq.s32.totalorder %s16, 2
      %p121 = por %p119, %p120
      %p123 = scmp.ne.s32.totalorder %s108, %s122
      %p124 = scmp.eq.s32.totalorder %s16, 0
      %p125 = por %p123, %p124
      %s126 = ssub.s32 %s17, %s29
      %p127 = scmp.eq.s32.totalorder %s126, 0
      %s129 = sadd.s32 %s128, 1
      %s130 = scalar_select %p127, %s128, %s129
      %p133 = pneg %p127
      %p134 = scmp.eq.s32.totalorder %s10, 2
      %p135 = por %p133, %p134
      %p136 = scmp.ne.s32.totalorder %s128, %s131
      %p137 = scmp.eq.s32.totalorder %s10, 0
      %p138 = por %p136, %p137
      %p139 = scmp.ne.s32.totalorder %s128, %s131
      %p140 = scmp.eq.s32.totalorder %s15, 2
      %p141 = por %p139, %p140
      %p142 = scmp.ne.s32.totalorder %s131, %s132
      %p143 = scmp.eq.s32.totalorder %s15, 0
      %p144 = por %p142, %p143
      %p145 = scmp.ne.s32.totalorder %s131, %s132
      %p146 = scmp.eq.s32.totalorder %s16, 2
      %p147 = por %p145, %p146
      %p149 = scmp.ne.s32.totalorder %s132, %s148
      %p150 = scmp.eq.s32.totalorder %s16, 0
      %p151 = por %p149, %p150
      %p152 = scmp.le.s32.totalorder 1, %s10
      %p153 = scmp.lt.s32.totalorder %s10, 4
      %p154 = pnand %p152, %p153
      %p155 = pneg %p154
      // Predicated region
      $region9: #{global_att_conv_forward.3} parent=5 // pred_check
        _
      $region10: #{global_att_conv_forward.3} parent=5 // pred_check_branch
        %157 = sbr.rel (%p154) target = $region12
      $region11: #{global_att_conv_forward.3} parent=5 // pred_region
        %s158 = ssub.s32 %s10, 1
        // Predicated region
        $region13: #{global_att_conv_forward.3} parent=11 // pred_check
          %p159 = pneg %p97
        $region14: #{global_att_conv_forward.3} parent=11 // pred_check_branch
          %161 = sbr.rel (%p159) target = $region16
        $region15: #{global_att_conv_forward.3} parent=11 // pred_region
          _
        $region16: #{global_att_conv_forward.3} parent=11 // pred_fallthru
          _
        // Predicated region
        $region17: #{global_att_conv_forward.3} parent=11 // pred_check
          %p162 = pneg %p118
        $region18: #{global_att_conv_forward.3} parent=11 // pred_check_branch
          %164 = sbr.rel (%p162) target = $region20
        $region19: #{global_att_conv_forward.3} parent=11 // pred_region
          _
        $region20: #{global_att_conv_forward.3} parent=11 // pred_fallthru
          _
      $region12: #{global_att_conv_forward.3} parent=5 // pred_fallthru
        _
      %p165 = scmp.lt.s32.totalorder %s10, 3
      // Predicated region
      $region21: #{global_att_conv_forward.3} parent=5 // pred_check
        %p166 = pneg %p165
      $region22: #{global_att_conv_forward.3} parent=5 // pred_check_branch
        %168 = sbr.rel (%p166) target = $region24
      $region23: #{global_att_conv_forward.3} parent=5 // pred_region
        // Predicated region
        $region25: #{global_att_conv_forward.3} parent=23 // pred_check
          %p169 = pneg %p44
        $region26: #{global_att_conv_forward.3} parent=23 // pred_check_branch
          %171 = sbr.rel (%p169) target = $region28
        $region27: #{global_att_conv_forward.3} parent=23 // pred_region
          %s172 = sand.u32 %s34, 1
          %s173 = sand.u32 %s34, 1
          %s174 = smul.addr %s173, 64
          %s175 = scalar_lea.vmem [#allocation3], %s174
          %s176 = smul.u32 4, %s17
          %s177 = smul.u32 4, %s18
          %s178 = smul.addr %s176, 12
          %s179 = sadd.s32 %s177, %s178
          %s180 = smul.addr %s179, 4
          %s181 = scalar_lea.vmem %s0, %s180
          // Predicated region
          $region29: #{global_att_conv_forward.3} parent=27 // pred_check
            _
          $region30: #{global_att_conv_forward.3} parent=27 // pred_check_branch
            %183 = sbr.rel (0) target = $region32
          $region31: #{global_att_conv_forward.3} parent=27 // pred_region
            // Predicated region
            $region33: #{global_att_conv_forward.3} parent=31 // pred_check
              _
            $region34: #{global_att_conv_forward.3} parent=31 // pred_check_branch
              %185 = sbr.rel (0) target = $region36
            $region35: #{global_att_conv_forward.3} parent=31 // pred_region
              loop: start=0, step=1, limit=1
              $region37: #{global_att_conv_forward.3} parent=35 // loop_pre_header
                _
              $region38: #{global_att_conv_forward.3} parent=35 // loop_header
                %s187 = sphi 0, %s191
                %p188 = scmp.ge.s32.totalorder %s187, 1
                %s192 = sphi %s181, %s181
                %s193 = sphi %s175, %s175
              $region39: #{global_att_conv_forward.3} parent=35 // loop_header_branch
                %190 = sbr.rel (%p188) target = $region43
              $region40: #{global_att_conv_forward.3} parent=35 // loop_body
                %v194 = vld [vmem:[%s192] sm:$0xff]
                %195 = vst [vmem:[%s193] sm:$0xff] %v194
                %v196 = vld [vmem:[%s192 + $0x8] sm:$0xff]
                %197 = vst [vmem:[%s193 + $0x8] sm:$0xff] %v196
                %v198 = vld [vmem:[%s192 + $0x30] sm:$0xff]
                %199 = vst [vmem:[%s193 + $0x10] sm:$0xff] %v198
                %v200 = vld [vmem:[%s192 + $0x38] sm:$0xff]
                %201 = vst [vmem:[%s193 + $0x18] sm:$0xff] %v200
                %v202 = vld [vmem:[%s192 + $0x60] sm:$0xff]
                %203 = vst [vmem:[%s193 + $0x20] sm:$0xff] %v202
                %v204 = vld [vmem:[%s192 + $0x68] sm:$0xff]
                %205 = vst [vmem:[%s193 + $0x28] sm:$0xff] %v204
                %v206 = vld [vmem:[%s192 + $0x90] sm:$0xff]
                %207 = vst [vmem:[%s193 + $0x30] sm:$0xff] %v206
                %v208 = vld [vmem:[%s192 + $0x98] sm:$0xff]
                %209 = vst [vmem:[%s193 + $0x38] sm:$0xff] %v208
              $region41: #{global_att_conv_forward.3} parent=35 // loop_footer
                %s191 = sadd.s32 1, %s187
              $region42: #{global_att_conv_forward.3} parent=35 // loop_footer_branch
                %186 = sbr.rel target = $region38
              $region43: #{global_att_conv_forward.3} parent=35 // loop_exit
                _
            $region36: #{global_att_conv_forward.3} parent=31 // pred_fallthru
              _
            // Predicated region
            $region44: #{global_att_conv_forward.3} parent=31 // pred_check
              _
            $region45: #{global_att_conv_forward.3} parent=31 // pred_check_branch
              %211 = sbr.rel target = $region47
            $region46: #{global_att_conv_forward.3} parent=31 // pred_region
              _
            $region47: #{global_att_conv_forward.3} parent=31 // pred_fallthru
              _
          $region32: #{global_att_conv_forward.3} parent=27 // pred_fallthru
            _
          %212 = vnop
        $region28: #{global_att_conv_forward.3} parent=23 // pred_fallthru
          _
        // Predicated region
        $region48: #{global_att_conv_forward.3} parent=23 // pred_check
          %p213 = pneg %p70
        $region49: #{global_att_conv_forward.3} parent=23 // pred_check_branch
          %215 = sbr.rel (%p213) target = $region51
        $region50: #{global_att_conv_forward.3} parent=23 // pred_region
          %s216 = smul.u32 64, %s18
          %p217 = scmp.lt.s32.totalorder %s216, 191
          %s218 = scalar_select %p217, %s216, 191
          %s219 = smul.addr %s218, 4
          %s220 = scalar_lea.vmem %s1, %s219
          %s221 = smul.u32 64, %s18
        $region51: #{global_att_conv_forward.3} parent=23 // pred_fallthru
          _
      $region24: #{global_att_conv_forward.3} parent=5 // pred_fallthru
        _
      %p222 = scmp.le.s32.totalorder 1, %s10
      %p223 = scmp.lt.s32.totalorder %s10, 4
      %p224 = pnand %p222, %p223
      %p225 = pneg %p224
      // Predicated region
      $region52: #{global_att_conv_forward.3} parent=5 // pred_check
        _
      $region53: #{global_att_conv_forward.3} parent=5 // pred_check_branch
        %227 = sbr.rel (%p224) target = $region55
      $region54: #{global_att_conv_forward.3} parent=5 // pred_region
        %s228 = ssub.s32 %s10, 1
        %s229 = sand.u32 %s37, 1
        %s230 = sand.u32 %s37, 1
        %s231 = smul.addr %s230, 64
        %s232 = scalar_lea.vmem [#allocation3], %s231
        // Predicated region
        $region56: #{global_att_conv_forward.3} parent=54 // pred_check
          %p233 = pneg %p50
        $region57: #{global_att_conv_forward.3} parent=54 // pred_check_branch
          %235 = sbr.rel (%p233) target = $region59
        $region58: #{global_att_conv_forward.3} parent=54 // pred_region
          _
        $region59: #{global_att_conv_forward.3} parent=54 // pred_fallthru
          _
        %s236 = sand.u32 %s37, 1
        %s237 = sand.u32 %s37, 1
        %s238 = smul.addr %s237, 64
        %s239 = scalar_lea.vmem [#allocation3], %s238
        %p240 = pneg %p50
        %p241 = pneg %p47
        %s242 = smul.u32 64, %s20
        %p243 = scmp.lt.s32.totalorder %s242, 191
        %s244 = scalar_select %p243, %s242, 191
        %s245 = smul.addr %s244, 4
        %s246 = scalar_lea.vmem %s1, %s245
        %p247 = pneg %p76
        %p248 = pneg %p73
        %p249 = pneg %p97
        %p250 = pneg %p94
        %p251 = pneg %p118
        %p252 = pneg %p115
        %p253 = pneg %p144
        %p254 = pneg %p141
        %s255 = smul.u32 4, %s19
        %p256 = scmp.lt.s32.totalorder %s255, 3
        %s257 = scalar_select %p256, %s255, 3
        %s258 = smul.addr %s257, 4
        %s259 = scalar_lea.vmem %s4, %s258
        %s260 = smul.u32 4, %s19
        %s261 = smul.u32 4, %s20
        %s262 = smul.u32 64, %s20
        %p263 = scmp.lt.s32.totalorder %s262, 191
        %s264 = scalar_select %p263, %s262, 191
        %s265 = smul.addr %s264, 4
        %s266 = scalar_lea.vmem %s1, %s265
        %s267 = smul.u32 64, %s20
        %s268 = smul.u32 4, %s19
        %p269 = scmp.lt.s32.totalorder %s268, 3
        %s270 = scalar_select %p269, %s268, 3
        %s271 = smul.addr %s270, 4
        %s272 = scalar_lea.vmem %s4, %s271
        %s273 = smul.u32 4, %s19
        %p274 = scmp.eq.s32.totalorder %s20, 0
        // Predicated region
        $region60: #{global_att_conv_forward.3} parent=54 // pred_check
          %p275 = pneg %p274
        $region61: #{global_att_conv_forward.3} parent=54 // pred_check_branch
          %277 = sbr.rel (%p275) target = $region63
        $region62: #{global_att_conv_forward.3} parent=54 // pred_region
          %278 = vst [vmem:[#allocation2] sm:$0xff] 0.0
          %279 = vst [vmem:[#allocation2 + $0x8] sm:$0xff] 0.0
          %280 = vst [vmem:[#allocation2 + $0x10] sm:$0xff] 0.0
          %281 = vst [vmem:[#allocation2 + $0x18] sm:$0xff] 0.0
        $region63: #{global_att_conv_forward.3} parent=54 // pred_fallthru
          _
        %v282 = vld [vmem:[#allocation2] sm:$0xff]
        %v283 = vld [vmem:[#allocation2 + $0x8] sm:$0xff]
        %v284 = vld [vmem:[#allocation2 + $0x10] sm:$0xff]
        %v285 = vld [vmem:[#allocation2 + $0x18] sm:$0xff]
        %v286 = vld [vmem:[%s232] sm:$0xff]
        %v287 = vld [vmem:[%s232 + $0x8] sm:$0xff]
        %v288 = vld [vmem:[%s232 + $0x10] sm:$0xff]
        %v289 = vld [vmem:[%s232 + $0x18] sm:$0xff]
        %v290 = vld [vmem:[%s232 + $0x20] sm:$0xff]
        %v291 = vld [vmem:[%s232 + $0x28] sm:$0xff]
        %v292 = vld [vmem:[%s232 + $0x30] sm:$0xff]
        %v293 = vld [vmem:[%s232 + $0x38] sm:$0xff]
        %v294 = vld [vmem:[%s266] sm:$0xf]
        %v295 = vld [vmem:[%s266 + $0x4] sm:$0xf]
        %v296 = vld [vmem:[%s266 + $0x8] sm:$0xf]
        %v297 = vld [vmem:[%s266 + $0xc] sm:$0xf]
        %v298 = vld [vmem:[%s266 + $0x10] sm:$0xf]
        %v299 = vld [vmem:[%s266 + $0x14] sm:$0xf]
        %v300 = vld [vmem:[%s266 + $0x18] sm:$0xf]
        %v301 = vld [vmem:[%s266 + $0x1c] sm:$0xf]
        %v302 = vld [vmem:[%s266 + $0x20] sm:$0xf]
        %v303 = vld [vmem:[%s266 + $0x24] sm:$0xf]
        %v304 = vld [vmem:[%s266 + $0x28] sm:$0xf]
        %v305 = vld [vmem:[%s266 + $0x2c] sm:$0xf]
        %v306 = vld [vmem:[%s266 + $0x30] sm:$0xf]
        %v307 = vld [vmem:[%s266 + $0x34] sm:$0xf]
        %v308 = vld [vmem:[%s266 + $0x38] sm:$0xf]
        %v309 = vld [vmem:[%s266 + $0x3c] sm:$0xf]
        %v310 = vld [vmem:[%s266 + $0x40] sm:$0xf]
        %v311 = vld [vmem:[%s266 + $0x44] sm:$0xf]
        %v312 = vld [vmem:[%s266 + $0x48] sm:$0xf]
        %v313 = vld [vmem:[%s266 + $0x4c] sm:$0xf]
        %v314 = vld [vmem:[%s266 + $0x50] sm:$0xf]
        %v315 = vld [vmem:[%s266 + $0x54] sm:$0xf]
        %v316 = vld [vmem:[%s266 + $0x58] sm:$0xf]
        %v317 = vld [vmem:[%s266 + $0x5c] sm:$0xf]
        %v318 = vld [vmem:[%s266 + $0x60] sm:$0xf]
        %v319 = vld [vmem:[%s266 + $0x64] sm:$0xf]
        %v320 = vld [vmem:[%s266 + $0x68] sm:$0xf]
        %v321 = vld [vmem:[%s266 + $0x6c] sm:$0xf]
        %v322 = vld [vmem:[%s266 + $0x70] sm:$0xf]
        %v323 = vld [vmem:[%s266 + $0x74] sm:$0xf]
        %v324 = vld [vmem:[%s266 + $0x78] sm:$0xf]
        %v325 = vld [vmem:[%s266 + $0x7c] sm:$0xf]
        %v326 = vld [vmem:[%s266 + $0x80] sm:$0xf]
        %v327 = vld [vmem:[%s266 + $0x84] sm:$0xf]
        %v328 = vld [vmem:[%s266 + $0x88] sm:$0xf]
        %v329 = vld [vmem:[%s266 + $0x8c] sm:$0xf]
        %v330 = vld [vmem:[%s266 + $0x90] sm:$0xf]
        %v331 = vld [vmem:[%s266 + $0x94] sm:$0xf]
        %v332 = vld [vmem:[%s266 + $0x98] sm:$0xf]
        %v333 = vld [vmem:[%s266 + $0x9c] sm:$0xf]
        %v334 = vld [vmem:[%s266 + $0xa0] sm:$0xf]
        %v335 = vld [vmem:[%s266 + $0xa4] sm:$0xf]
        %v336 = vld [vmem:[%s266 + $0xa8] sm:$0xf]
        %v337 = vld [vmem:[%s266 + $0xac] sm:$0xf]
        %v338 = vld [vmem:[%s266 + $0xb0] sm:$0xf]
        %v339 = vld [vmem:[%s266 + $0xb4] sm:$0xf]
        %v340 = vld [vmem:[%s266 + $0xb8] sm:$0xf]
        %v341 = vld [vmem:[%s266 + $0xbc] sm:$0xf]
        %v342 = vld [vmem:[%s266 + $0xc0] sm:$0xf]
        %v343 = vld [vmem:[%s266 + $0xc4] sm:$0xf]
        %v344 = vld [vmem:[%s266 + $0xc8] sm:$0xf]
        %v345 = vld [vmem:[%s266 + $0xcc] sm:$0xf]
        %v346 = vld [vmem:[%s266 + $0xd0] sm:$0xf]
        %v347 = vld [vmem:[%s266 + $0xd4] sm:$0xf]
        %v348 = vld [vmem:[%s266 + $0xd8] sm:$0xf]
        %v349 = vld [vmem:[%s266 + $0xdc] sm:$0xf]
        %v350 = vld [vmem:[%s266 + $0xe0] sm:$0xf]
        %v351 = vld [vmem:[%s266 + $0xe4] sm:$0xf]
        %v352 = vld [vmem:[%s266 + $0xe8] sm:$0xf]
        %v353 = vld [vmem:[%s266 + $0xec] sm:$0xf]
        %v354 = vld [vmem:[%s266 + $0xf0] sm:$0xf]
        %v355 = vld [vmem:[%s266 + $0xf4] sm:$0xf]
        %v356 = vld [vmem:[%s266 + $0xf8] sm:$0xf]
        %v357 = vld [vmem:[%s266 + $0xfc] sm:$0xf]
        %v366 = vunpack.c.l.b16 %v286
        %v367 = vunpack.c.h.b16 %v286
        %v368 = vunpack.c.l.b16 %v287
        %v369 = vunpack.c.h.b16 %v287
        %v370 = vunpack.c.l.b16 %v288
        %v371 = vunpack.c.h.b16 %v288
        %v372 = vunpack.c.l.b16 %v289
        %v373 = vunpack.c.h.b16 %v289
        %v374 = vunpack.c.l.b16 %v290
        %v375 = vunpack.c.h.b16 %v290
        %v376 = vunpack.c.l.b16 %v291
        %v377 = vunpack.c.h.b16 %v291
        %v378 = vunpack.c.l.b16 %v292
        %v379 = vunpack.c.h.b16 %v292
        %v380 = vunpack.c.l.b16 %v293
        %v381 = vunpack.c.h.b16 %v293
        %v382 = vpack.c.b16 %v370, %v366
        %v383 = vpack.c.b16 %v371, %v367
        %v384 = vpack.c.b16 %v372, %v368
        %v385 = vpack.c.b16 %v373, %v369
        %v386 = vpack.c.b16 %v378, %v374
        %v387 = vpack.c.b16 %v379, %v375
        %v388 = vpack.c.b16 %v380, %v376
        %v389 = vpack.c.b16 %v381, %v377
        %v462 = vunpack.c.l.b16 %v294
        %v463 = vunpack.c.l.b16 %v295
        %v464 = vunpack.c.l.b16 %v296
        %v465 = vunpack.c.l.b16 %v297
        %v466 = vunpack.c.l.b16 %v298
        %v467 = vunpack.c.l.b16 %v299
        %v468 = vunpack.c.l.b16 %v300
        %v469 = vunpack.c.l.b16 %v301
        %v470 = vunpack.c.l.b16 %v302
        %v471 = vunpack.c.l.b16 %v303
        %v472 = vunpack.c.l.b16 %v304
        %v473 = vunpack.c.l.b16 %v305
        %v474 = vunpack.c.l.b16 %v306
        %v475 = vunpack.c.l.b16 %v307
        %v476 = vunpack.c.l.b16 %v308
        %v477 = vunpack.c.l.b16 %v309
        %v478 = vunpack.c.l.b16 %v310
        %v479 = vunpack.c.l.b16 %v311
        %v480 = vunpack.c.l.b16 %v312
        %v481 = vunpack.c.l.b16 %v313
        %v482 = vunpack.c.l.b16 %v314
        %v483 = vunpack.c.l.b16 %v315
        %v484 = vunpack.c.l.b16 %v316
        %v485 = vunpack.c.l.b16 %v317
        %v486 = vunpack.c.l.b16 %v318
        %v487 = vunpack.c.l.b16 %v319
        %v488 = vunpack.c.l.b16 %v320
        %v489 = vunpack.c.l.b16 %v321
        %v490 = vunpack.c.l.b16 %v322
        %v491 = vunpack.c.l.b16 %v323
        %v492 = vunpack.c.l.b16 %v324
        %v493 = vunpack.c.l.b16 %v325
        %v494 = vunpack.c.l.b16 %v326
        %v495 = vunpack.c.l.b16 %v327
        %v496 = vunpack.c.l.b16 %v328
        %v497 = vunpack.c.l.b16 %v329
        %v498 = vunpack.c.l.b16 %v330
        %v499 = vunpack.c.l.b16 %v331
        %v500 = vunpack.c.l.b16 %v332
        %v501 = vunpack.c.l.b16 %v333
        %v502 = vunpack.c.l.b16 %v334
        %v503 = vunpack.c.l.b16 %v335
        %v504 = vunpack.c.l.b16 %v336
        %v505 = vunpack.c.l.b16 %v337
        %v506 = vunpack.c.l.b16 %v338
        %v507 = vunpack.c.l.b16 %v339
        %v508 = vunpack.c.l.b16 %v340
        %v509 = vunpack.c.l.b16 %v341
        %v510 = vunpack.c.l.b16 %v342
        %v511 = vunpack.c.l.b16 %v343
        %v512 = vunpack.c.l.b16 %v344
        %v513 = vunpack.c.l.b16 %v345
        %v514 = vunpack.c.l.b16 %v346
        %v515 = vunpack.c.l.b16 %v347
        %v516 = vunpack.c.l.b16 %v348
        %v517 = vunpack.c.l.b16 %v349
        %v518 = vunpack.c.l.b16 %v350
        %v519 = vunpack.c.l.b16 %v351
        %v520 = vunpack.c.l.b16 %v352
        %v521 = vunpack.c.l.b16 %v353
        %v522 = vunpack.c.l.b16 %v354
        %v523 = vunpack.c.l.b16 %v355
        %v524 = vunpack.c.l.b16 %v356
        %v525 = vunpack.c.l.b16 %v357
        %v526 = vpack.c.b16 %v463, %v462
        %v527 = vpack.c.b16 %v465, %v464
        %v528 = vpack.c.b16 %v467, %v466
        %v529 = vpack.c.b16 %v469, %v468
        %v530 = vpack.c.b16 %v471, %v470
        %v531 = vpack.c.b16 %v473, %v472
        %v532 = vpack.c.b16 %v475, %v474
        %v533 = vpack.c.b16 %v477, %v476
        %v534 = vpack.c.b16 %v479, %v478
        %v535 = vpack.c.b16 %v481, %v480
        %v536 = vpack.c.b16 %v483, %v482
        %v537 = vpack.c.b16 %v485, %v484
        %v538 = vpack.c.b16 %v487, %v486
        %v539 = vpack.c.b16 %v489, %v488
        %v540 = vpack.c.b16 %v491, %v490
        %v541 = vpack.c.b16 %v493, %v492
        %v542 = vpack.c.b16 %v495, %v494
        %v543 = vpack.c.b16 %v497, %v496
        %v544 = vpack.c.b16 %v499, %v498
        %v545 = vpack.c.b16 %v501, %v500
        %v546 = vpack.c.b16 %v503, %v502
        %v547 = vpack.c.b16 %v505, %v504
        %v548 = vpack.c.b16 %v507, %v506
        %v549 = vpack.c.b16 %v509, %v508
        %v550 = vpack.c.b16 %v511, %v510
        %v551 = vpack.c.b16 %v513, %v512
        %v552 = vpack.c.b16 %v515, %v514
        %v553 = vpack.c.b16 %v517, %v516
        %v554 = vpack.c.b16 %v519, %v518
        %v555 = vpack.c.b16 %v521, %v520
        %v556 = vpack.c.b16 %v523, %v522
        %v557 = vpack.c.b16 %v525, %v524
        %590 = vmatpush.bf16.msra.mxu0 %v533
        %591 = vmatpush.bf16.msra.mxu0 %v532
        %592 = vmatpush.bf16.msra.mxu0 %v531
        %593 = vmatpush.bf16.msra.mxu0 %v530
        %594 = vmatpush.bf16.msra.mxu0 %v529
        %595 = vmatpush.bf16.msra.mxu0 %v528
        %596 = vmatpush.bf16.msra.mxu0 %v527
        %597 = vmatpush.bf16.msra.mxu0 %v526
        %598 = vmatmul.bf16.gmra.mxu0 %v382
        %v599 = vpop.f32.mrf.mxu0
        %v600 = vadd.f32 0.0, %v599
        %v601 = vpop.f32.mrf.mxu0
        %v602 = vadd.f32 0.0, %v601
        %603 = vmatmul.bf16.gmra.mxu0 %v386
        %v604 = vpop.f32.mrf.mxu0
        %v605 = vadd.f32 0.0, %v604
        %v606 = vpop.f32.mrf.mxu0
        %v607 = vadd.f32 0.0, %v606
        %608 = vdwg.mxu0
        %609 = vmatpush.bf16.msra.mxu0 %v541
        %610 = vmatpush.bf16.msra.mxu0 %v540
        %611 = vmatpush.bf16.msra.mxu0 %v539
        %612 = vmatpush.bf16.msra.mxu0 %v538
        %613 = vmatpush.bf16.msra.mxu0 %v537
        %614 = vmatpush.bf16.msra.mxu0 %v536
        %615 = vmatpush.bf16.msra.mxu0 %v535
        %616 = vmatpush.bf16.msra.mxu0 %v534
        %617 = vmatmul.bf16.gmra.mxu0 %v383
        %v618 = vpop.f32.mrf.mxu0
        %v619 = vadd.f32 %v600, %v618
        %v620 = vpop.f32.mrf.mxu0
        %v621 = vadd.f32 %v602, %v620
        %622 = vmatmul.bf16.gmra.mxu0 %v387
        %v623 = vpop.f32.mrf.mxu0
        %v624 = vadd.f32 %v605, %v623
        %v625 = vpop.f32.mrf.mxu0
        %v626 = vadd.f32 %v607, %v625
        %627 = vdwg.mxu0
        %628 = vmatpush.bf16.msra.mxu0 %v549
        %629 = vmatpush.bf16.msra.mxu0 %v548
        %630 = vmatpush.bf16.msra.mxu0 %v547
        %631 = vmatpush.bf16.msra.mxu0 %v546
        %632 = vmatpush.bf16.msra.mxu0 %v545
        %633 = vmatpush.bf16.msra.mxu0 %v544
        %634 = vmatpush.bf16.msra.mxu0 %v543
        %635 = vmatpush.bf16.msra.mxu0 %v542
        %636 = vmatmul.bf16.gmra.mxu0 %v384
        %v637 = vpop.f32.mrf.mxu0
        %v638 = vadd.f32 %v619, %v637
        %v639 = vpop.f32.mrf.mxu0
        %v640 = vadd.f32 %v621, %v639
        %641 = vmatmul.bf16.gmra.mxu0 %v388
        %v642 = vpop.f32.mrf.mxu0
        %v643 = vadd.f32 %v624, %v642
        %v644 = vpop.f32.mrf.mxu0
        %v645 = vadd.f32 %v626, %v644
        %646 = vdwg.mxu0
        %647 = vmatpush.bf16.msra.mxu0 %v557
        %648 = vmatpush.bf16.msra.mxu0 %v556
        %649 = vmatpush.bf16.msra.mxu0 %v555
        %650 = vmatpush.bf16.msra.mxu0 %v554
        %651 = vmatpush.bf16.msra.mxu0 %v553
        %652 = vmatpush.bf16.msra.mxu0 %v552
        %653 = vmatpush.bf16.msra.mxu0 %v551
        %654 = vmatpush.bf16.msra.mxu0 %v550
        %655 = vmatmul.bf16.gmra.mxu0 %v385
        %v656 = vpop.f32.mrf.mxu0
        %v657 = vadd.f32 %v638, %v656
        %v658 = vpop.f32.mrf.mxu0
        %v659 = vadd.f32 %v640, %v658
        %660 = vmatmul.bf16.gmra.mxu0 %v389
        %v661 = vpop.f32.mrf.mxu0
        %v662 = vadd.f32 %v643, %v661
        %v663 = vpop.f32.mrf.mxu0
        %v664 = vadd.f32 %v645, %v663
        %665 = vdwg.mxu0
        %v666 = vadd.f32 %v282, %v657
        %v667 = vadd.f32 %v283, %v659
        %v668 = vadd.f32 %v284, %v662
        %v669 = vadd.f32 %v285, %v664
        %670 = vst [vmem:[#allocation2] sm:$0xff] %v666
        %671 = vst [vmem:[#allocation2 + $0x8] sm:$0xff] %v667
        %672 = vst [vmem:[#allocation2 + $0x10] sm:$0xff] %v668
        %673 = vst [vmem:[#allocation2 + $0x18] sm:$0xff] %v669
        %p674 = scmp.eq.s32.totalorder %s20, 2
        // Predicated region
        $region64: #{global_att_conv_forward.3} parent=54 // pred_check
          %p675 = pneg %p674
        $region65: #{global_att_conv_forward.3} parent=54 // pred_check_branch
          %677 = sbr.rel (%p675) target = $region67
        $region66: #{global_att_conv_forward.3} parent=54 // pred_region
          %v678 = vld [vmem:[#allocation2] sm:$0xff]
          %v679 = vld [vmem:[#allocation2 + $0x8] sm:$0xff]
          %v680 = vld [vmem:[#allocation2 + $0x10] sm:$0xff]
          %v681 = vld [vmem:[#allocation2 + $0x18] sm:$0xff]
          %v682 = vld [vmem:[%s2] sm:$0x1]
          %v684 = vperm.slane %v682, 0
          %v686 = vmul.f32 %v678, %v684
          %v687 = vmul.f32 %v679, %v684
          %v688 = vmul.f32 %v680, %v684
          %v689 = vmul.f32 %v681, %v684
          %v690 = vld [vmem:[%s3] sm:$0x1]
          %v692 = vperm.slane %v690, 0
          %v694 = vadd.f32 %v686, %v692
          %v695 = vadd.f32 %v687, %v692
          %v696 = vadd.f32 %v688, %v692
          %v697 = vadd.f32 %v689, %v692
          %v698 = vmax.f32 %v694, 0.0
          %v699 = vmax.f32 %v695, 0.0
          %v700 = vmax.f32 %v696, 0.0
          %v701 = vmax.f32 %v697, 0.0
          %v702 = vpack.c.bf16 %v698, %v698
          %v703 = vpack.c.bf16 %v699, %v699
          %v704 = vpack.c.bf16 %v700, %v700
          %v705 = vpack.c.bf16 %v701, %v701
          %706 = vst [vmem:[%s272] sm:$0xf] %v702
          %707 = vst [vmem:[%s272 + $0x4] sm:$0xf] %v703
          %708 = vst [vmem:[%s272 + $0x8] sm:$0xf] %v704
          %709 = vst [vmem:[%s272 + $0xc] sm:$0xf] %v705
        $region67: #{global_att_conv_forward.3} parent=54 // pred_fallthru
          _
        %s710 = smul.u32 4, %s19
        %p711 = scmp.lt.s32.totalorder %s710, 3
        %s712 = scalar_select %p711, %s710, 3
        %s713 = smul.addr %s712, 4
        %s714 = scalar_lea.vmem %s4, %s713
        // Predicated region
        $region68: #{global_att_conv_forward.3} parent=54 // pred_check
          %p715 = pneg %p141
        $region69: #{global_att_conv_forward.3} parent=54 // pred_check_branch
          %717 = sbr.rel (%p715) target = $region71
        $region70: #{global_att_conv_forward.3} parent=54 // pred_region
          %s718 = smul.u32 4, %s19
        $region71: #{global_att_conv_forward.3} parent=54 // pred_fallthru
          _
        // Predicated region
        $region72: #{global_att_conv_forward.3} parent=54 // pred_check
          %p719 = pneg %p141
        $region73: #{global_att_conv_forward.3} parent=54 // pred_check_branch
          %721 = sbr.rel (%p719) target = $region75
        $region74: #{global_att_conv_forward.3} parent=54 // pred_region
          %s722 = smul.u32 4, %s19
          %p723 = scmp.lt.s32.totalorder %s722, 3
          %s724 = scalar_select %p723, %s722, 3
          %s725 = smul.addr %s724, 4
          %s726 = scalar_lea.vmem %s4, %s725
        $region75: #{global_att_conv_forward.3} parent=54 // pred_fallthru
          _
      $region55: #{global_att_conv_forward.3} parent=5 // pred_fallthru
        _
      %p727 = scmp.le.s32.totalorder 2, %s10
      // Predicated region
      $region76: #{global_att_conv_forward.3} parent=5 // pred_check
        %p728 = pneg %p727
      $region77: #{global_att_conv_forward.3} parent=5 // pred_check_branch
        %730 = sbr.rel (%p728) target = $region79
      $region78: #{global_att_conv_forward.3} parent=5 // pred_region
        %s731 = ssub.s32 %s10, 2
      $region79: #{global_att_conv_forward.3} parent=5 // pred_fallthru
        _
    $region6: #{global_att_conv_forward.3} parent=1 // loop_footer
      %s14 = sadd.s32 1, %s10
    $region7: #{global_att_conv_forward.3} parent=1 // loop_footer_branch
      %9 = sbr.rel target = $region3
    $region8: #{global_att_conv_forward.3} parent=1 // loop_exit
      _

// kernel: global_att_conv_forward.5
$region0: #{global_att_conv_forward.5}
  #allocation0 [shape = 'u32[]', space=smem, size = 0x4, offset = 0x4, fixed_abs, tag = 'smem constant byte address 0x4 - core index']
  #allocation1 [shape = 'u32[72,128]{1,0:T(1,128)}', space=vmem, size = 0x9000, scoped, tag = 'internal scratch']
  %s0 = inlined_call_operand.vmem [shape: bf16[32,128], index: 0, kind: input, shape index: {}]
  %s1 = inlined_call_operand.vmem [shape: bf16[128,128], index: 1, kind: input, shape index: {}]
  %s2 = inlined_call_operand.vmem [shape: f32[1,128], index: 2, kind: input, shape index: {}]
  %s3 = inlined_call_operand.vmem [shape: f32[1,128], index: 3, kind: input, shape index: {}]
  %s4 = inlined_call_operand.vmem [shape: bf16[128,128], index: 4, kind: input, shape index: {}]
  %s5 = inlined_call_operand.vmem [shape: f32[1,128], index: 5, kind: input, shape index: {}]
  %s6 = inlined_call_operand.hbm [shape: f32[32,128], index: 6, kind: output, shape index: {}]
  %s7 = sld [smem:[#allocation0]]
  $region34: #{global_att_conv_forward.5} parent=0
    _
  %s9 = ssub.s32 1, %s7
  %s10 = scalar_select 0, %s9, %s7
  $region1: #{global_att_conv_forward.5} parent=0
    #allocation2 [shape = 'u8[16384]{0}', space=vmem, size = 0x4000, scoped, tag = 'output window, operand 0, single buffered']
    #allocation3 [shape = 's32[1]{0}', space=sflag, size = 0x4, scoped, tag = 'scoped memory for global_att_conv_forward.5']
    %11 = vsyncpa [#allocation3], 0
    // Predicated region
    $region2: #{global_att_conv_forward.5} parent=1 // pred_check
      _
    $region3: #{global_att_conv_forward.5} parent=1 // pred_check_branch
      %13 = sbr.rel (0) target = $region5
    $region4: #{global_att_conv_forward.5} parent=1 // pred_region
      _
    $region5: #{global_att_conv_forward.5} parent=1 // pred_fallthru
      _
    // Predicated region
    $region6: #{global_att_conv_forward.5} parent=1 // pred_check
      _
    $region7: #{global_att_conv_forward.5} parent=1 // pred_check_branch
      %15 = sbr.rel (0) target = $region9
    $region8: #{global_att_conv_forward.5} parent=1 // pred_region
      _
    $region9: #{global_att_conv_forward.5} parent=1 // pred_fallthru
      _
    // Predicated region
    $region10: #{global_att_conv_forward.5} parent=1 // pred_check
      _
    $region11: #{global_att_conv_forward.5} parent=1 // pred_check_branch
      %17 = sbr.rel (0) target = $region13
    $region12: #{global_att_conv_forward.5} parent=1 // pred_region
      _
    $region13: #{global_att_conv_forward.5} parent=1 // pred_fallthru
      _
    // Predicated region
    $region14: #{global_att_conv_forward.5} parent=1 // pred_check
      _
    $region15: #{global_att_conv_forward.5} parent=1 // pred_check_branch
      %19 = sbr.rel (0) target = $region17
    $region16: #{global_att_conv_forward.5} parent=1 // pred_region
      _
    $region17: #{global_att_conv_forward.5} parent=1 // pred_fallthru
      _
    // Predicated region
    $region18: #{global_att_conv_forward.5} parent=1 // pred_check
      _
    $region19: #{global_att_conv_forward.5} parent=1 // pred_check_branch
      %21 = sbr.rel (0) target = $region21
    $region20: #{global_att_conv_forward.5} parent=1 // pred_region
      _
    $region21: #{global_att_conv_forward.5} parent=1 // pred_fallthru
      _
    // Predicated region
    $region22: #{global_att_conv_forward.5} parent=1 // pred_check
      _
    $region23: #{global_att_conv_forward.5} parent=1 // pred_check_branch
      %23 = sbr.rel (0) target = $region25
    $region24: #{global_att_conv_forward.5} parent=1 // pred_region
      _
    $region25: #{global_att_conv_forward.5} parent=1 // pred_fallthru
      _
    %v24 = vld [vmem:[%s0] sm:$0xf]
    %v25 = vld [vmem:[%s0 + $0x4] sm:$0xf]
    %v26 = vld [vmem:[%s0 + $0x8] sm:$0xf]
    %v27 = vld [vmem:[%s0 + $0xc] sm:$0xf]
    %v28 = vld [vmem:[%s1] sm:$0xf]
    %v29 = vld [vmem:[%s1 + $0x4] sm:$0xf]
    %v30 = vld [vmem:[%s1 + $0x8] sm:$0xf]
    %v31 = vld [vmem:[%s1 + $0xc] sm:$0xf]
    %v32 = vld [vmem:[%s1 + $0x10] sm:$0xf]
    %v33 = vld [vmem:[%s1 + $0x14] sm:$0xf]
    %v34 = vld [vmem:[%s1 + $0x18] sm:$0xf]
    %v35 = vld [vmem:[%s1 + $0x1c] sm:$0xf]
    %v36 = vld [vmem:[%s1 + $0x20] sm:$0xf]
    %v37 = vld [vmem:[%s1 + $0x24] sm:$0xf]
    %v38 = vld [vmem:[%s1 + $0x28] sm:$0xf]
    %v39 = vld [vmem:[%s1 + $0x2c] sm:$0xf]
    %v40 = vld [vmem:[%s1 + $0x30] sm:$0xf]
    %v41 = vld [vmem:[%s1 + $0x34] sm:$0xf]
    %v42 = vld [vmem:[%s1 + $0x38] sm:$0xf]
    %v43 = vld [vmem:[%s1 + $0x3c] sm:$0xf]
    %v48 = vunpack.c.l.b16 %v24
    %v49 = vunpack.c.l.b16 %v25
    %v50 = vunpack.c.l.b16 %v26
    %v51 = vunpack.c.l.b16 %v27
    %v52 = vpack.c.b16 %v49, %v48
    %v53 = vpack.c.b16 %v51, %v50
    %v72 = vunpack.c.l.b16 %v28
    %v73 = vunpack.c.l.b16 %v29
    %v74 = vunpack.c.l.b16 %v30
    %v75 = vunpack.c.l.b16 %v31
    %v76 = vunpack.c.l.b16 %v32
    %v77 = vunpack.c.l.b16 %v33
    %v78 = vunpack.c.l.b16 %v34
    %v79 = vunpack.c.l.b16 %v35
    %v80 = vunpack.c.l.b16 %v36
    %v81 = vunpack.c.l.b16 %v37
    %v82 = vunpack.c.l.b16 %v38
    %v83 = vunpack.c.l.b16 %v39
    %v84 = vunpack.c.l.b16 %v40
    %v85 = vunpack.c.l.b16 %v41
    %v86 = vunpack.c.l.b16 %v42
    %v87 = vunpack.c.l.b16 %v43
    %v88 = vpack.c.b16 %v73, %v72
    %v89 = vpack.c.b16 %v75, %v74
    %v90 = vpack.c.b16 %v77, %v76
    %v91 = vpack.c.b16 %v79, %v78
    %v92 = vpack.c.b16 %v81, %v80
    %v93 = vpack.c.b16 %v83, %v82
    %v94 = vpack.c.b16 %v85, %v84
    %v95 = vpack.c.b16 %v87, %v86
    %104 = vmatpush.bf16.msra.mxu0 %v95
    %105 = vmatpush.bf16.msra.mxu0 %v94
    %106 = vmatpush.bf16.msra.mxu0 %v93
    %107 = vmatpush.bf16.msra.mxu0 %v92
    %108 = vmatpush.bf16.msra.mxu0 %v91
    %109 = vmatpush.bf16.msra.mxu0 %v90
    %110 = vmatpush.bf16.msra.mxu0 %v89
    %111 = vmatpush.bf16.msra.mxu0 %v88
    %112 = vmatmul.bf16.gmra.mxu0 %v52
    %v113 = vpop.f32.mrf.mxu0
    %v114 = vadd.f32 0.0, %v113
    %v115 = vpop.f32.mrf.mxu0
    %v116 = vadd.f32 0.0, %v115
    %117 = vmatmul.bf16.gmra.mxu0 %v53
    %v118 = vpop.f32.mrf.mxu0
    %v119 = vadd.f32 0.0, %v118
    %v120 = vpop.f32.mrf.mxu0
    %v121 = vadd.f32 0.0, %v120
    %122 = vdwg.mxu0
    %v123 = vld [vmem:[%s2] sm:$0x1]
    %v125 = vperm.slane %v123, 0
    %v127 = vmul.f32 %v114, %v125
    %v128 = vmul.f32 %v116, %v125
    %v129 = vmul.f32 %v119, %v125
    %v130 = vmul.f32 %v121, %v125
    %v131 = vld [vmem:[%s3] sm:$0x1]
    %v133 = vperm.slane %v131, 0
    %v135 = vadd.f32 %v127, %v133
    %v136 = vadd.f32 %v128, %v133
    %v137 = vadd.f32 %v129, %v133
    %v138 = vadd.f32 %v130, %v133
    %v139 = vmax.f32 %v135, 0.0
    %v140 = vmax.f32 %v136, 0.0
    %v141 = vmax.f32 %v137, 0.0
    %v142 = vmax.f32 %v138, 0.0
    %v143 = vpack.c.bf16 %v140, %v139
    %v144 = vpack.c.bf16 %v142, %v141
    %v145 = vld [vmem:[%s4] sm:$0xf]
    %v146 = vld [vmem:[%s4 + $0x4] sm:$0xf]
    %v147 = vld [vmem:[%s4 + $0x8] sm:$0xf]
    %v148 = vld [vmem:[%s4 + $0xc] sm:$0xf]
    %v149 = vld [vmem:[%s4 + $0x10] sm:$0xf]
    %v150 = vld [vmem:[%s4 + $0x14] sm:$0xf]
    %v151 = vld [vmem:[%s4 + $0x18] sm:$0xf]
    %v152 = vld [vmem:[%s4 + $0x1c] sm:$0xf]
    %v153 = vld [vmem:[%s4 + $0x20] sm:$0xf]
    %v154 = vld [vmem:[%s4 + $0x24] sm:$0xf]
    %v155 = vld [vmem:[%s4 + $0x28] sm:$0xf]
    %v156 = vld [vmem:[%s4 + $0x2c] sm:$0xf]
    %v157 = vld [vmem:[%s4 + $0x30] sm:$0xf]
    %v158 = vld [vmem:[%s4 + $0x34] sm:$0xf]
    %v159 = vld [vmem:[%s4 + $0x38] sm:$0xf]
    %v160 = vld [vmem:[%s4 + $0x3c] sm:$0xf]
    %v161 = vld [vmem:[%s5] sm:$0x1]
    %v163 = vperm.slane %v161, 0
    %v181 = vunpack.c.l.b16 %v145
    %v182 = vunpack.c.l.b16 %v146
    %v183 = vunpack.c.l.b16 %v147
    %v184 = vunpack.c.l.b16 %v148
    %v185 = vunpack.c.l.b16 %v149
    %v186 = vunpack.c.l.b16 %v150
    %v187 = vunpack.c.l.b16 %v151
    %v188 = vunpack.c.l.b16 %v152
    %v189 = vunpack.c.l.b16 %v153
    %v190 = vunpack.c.l.b16 %v154
    %v191 = vunpack.c.l.b16 %v155
    %v192 = vunpack.c.l.b16 %v156
    %v193 = vunpack.c.l.b16 %v157
    %v194 = vunpack.c.l.b16 %v158
    %v195 = vunpack.c.l.b16 %v159
    %v196 = vunpack.c.l.b16 %v160
    %v197 = vpack.c.b16 %v182, %v181
    %v198 = vpack.c.b16 %v184, %v183
    %v199 = vpack.c.b16 %v186, %v185
    %v200 = vpack.c.b16 %v188, %v187
    %v201 = vpack.c.b16 %v190, %v189
    %v202 = vpack.c.b16 %v192, %v191
    %v203 = vpack.c.b16 %v194, %v193
    %v204 = vpack.c.b16 %v196, %v195
    %213 = vmatpush.bf16.msra.mxu0 %v204
    %214 = vmatpush.bf16.msra.mxu0 %v203
    %215 = vmatpush.bf16.msra.mxu0 %v202
    %216 = vmatpush.bf16.msra.mxu0 %v201
    %217 = vmatpush.bf16.msra.mxu0 %v200
    %218 = vmatpush.bf16.msra.mxu0 %v199
    %219 = vmatpush.bf16.msra.mxu0 %v198
    %220 = vmatpush.bf16.msra.mxu0 %v197
    %221 = vmatmul.bf16.gmra.mxu0 %v143
    %v222 = vpop.f32.mrf.mxu0
    %v223 = vadd.f32 %v163, %v222
    %v224 = vpop.f32.mrf.mxu0
    %v225 = vadd.f32 %v163, %v224
    %226 = vmatmul.bf16.gmra.mxu0 %v144
    %v227 = vpop.f32.mrf.mxu0
    %v228 = vadd.f32 %v163, %v227
    %v229 = vpop.f32.mrf.mxu0
    %v230 = vadd.f32 %v163, %v229
    %231 = vdwg.mxu0
    %232 = vst [vmem:[#allocation2] sm:$0xff] %v223
    %233 = vst [vmem:[#allocation2 + $0x8] sm:$0xff] %v225
    %234 = vst [vmem:[#allocation2 + $0x10] sm:$0xff] %v228
    %235 = vst [vmem:[#allocation2 + $0x18] sm:$0xff] %v230
    // Predicated region
    $region26: #{global_att_conv_forward.5} parent=1 // pred_check
      _
    $region27: #{global_att_conv_forward.5} parent=1 // pred_check_branch
      %237 = sbr.rel (0) target = $region29
    $region28: #{global_att_conv_forward.5} parent=1 // pred_region
      %239 = vsyncadd [#allocation3], 0
      %s240 = sshll.u32 [#allocation2], 4
      %s241 = int_to_ptr.vmem [resolvable:$true] %s240
      %s242 = sshll.u32 %s6, 4
      %s243 = int_to_ptr.hbm [resolvable:$true] %s242
      %248 = dma.vmem_to_hbm [thread:$0]  %s241, 512, %s243, [#allocation3], 128, 128, 8
    $region29: #{global_att_conv_forward.5} parent=1 // pred_fallthru
      _
    // Predicated region
    $region30: #{global_att_conv_forward.5} parent=1 // pred_check
      _
    $region31: #{global_att_conv_forward.5} parent=1 // pred_check_branch
      %250 = sbr.rel (0) target = $region33
    $region32: #{global_att_conv_forward.5} parent=1 // pred_region
      %252 = dma.done [#allocation3], 512
    $region33: #{global_att_conv_forward.5} parent=1 // pred_fallthru
      _
    %253 = vsyncpa [#allocation3], 1

// kernel: global_att_conv_forward.4
$region0: #{global_att_conv_forward.4}
  #allocation0 [shape = 'u32[]', space=smem, size = 0x4, offset = 0x4, fixed_abs, tag = 'smem constant byte address 0x4 - core index']
  #allocation1 [shape = 'u32[72,128]{1,0:T(1,128)}', space=vmem, size = 0x9000, scoped, tag = 'internal scratch']
  #allocation2 [shape = 'f32[32,128]{1,0:T(8,128)}', space=vmem, size = 0x4000, scoped, tag = 'scratch operand']
  %s0 = inlined_call_operand.vmem [shape: bf16[32,1536], index: 0, kind: input, shape index: {}]
  %s1 = inlined_call_operand.vmem [shape: bf16[1536,128], index: 1, kind: input, shape index: {}]
  %s2 = inlined_call_operand.vmem [shape: f32[1,128], index: 2, kind: input, shape index: {}]
  %s3 = inlined_call_operand.vmem [shape: f32[1,128], index: 3, kind: input, shape index: {}]
  %s4 = inlined_call_operand.vmem [shape: bf16[128,128], index: 4, kind: input, shape index: {}]
  %s5 = inlined_call_operand.vmem [shape: f32[32,128], index: 5, kind: output, shape index: {}]
  %s6 = sld [smem:[#allocation0]]
  $region84: #{global_att_conv_forward.4} parent=0
    _
  %s8 = ssub.s32 1, %s6
  %s9 = scalar_select 0, %s8, %s6
  $region1: #{global_att_conv_forward.4} parent=0
    #allocation3 [shape = 'u8[65536]{0}', space=vmem, size = 0x10000, scoped, tag = 'input window, operand 0']
    loop: start=0, step=1, limit=5
    $region2: #{global_att_conv_forward.4} parent=1 // loop_pre_header
      _
    $region3: #{global_att_conv_forward.4} parent=1 // loop_header
      %s11 = sphi 0, %s15
      %p12 = scmp.ge.s32.totalorder %s11, 5
      %s18 = sphi 0, %s30
      %s19 = sphi 0, %s26
      %s20 = sphi 0, %s18
      %s21 = sphi 0, %s19
      %s22 = sphi 0, %s20
      %s23 = sphi 0, %s21
      %s35 = sphi 0, %s37
      %s38 = sphi 0, %s35
      %s39 = sphi 0, %s38
      %s55 = sphi 0, %s39
      %s61 = sphi 0, %s63
      %s64 = sphi 0, %s61
      %s65 = sphi 0, %s64
      %s81 = sphi 0, %s65
      %s85 = sphi 0, %s85
      %s87 = sphi 0, %s85
      %s88 = sphi 0, %s87
      %s102 = sphi 0, %s88
      %s106 = sphi 0, %s106
      %s108 = sphi 0, %s106
      %s109 = sphi 0, %s108
      %s123 = sphi 0, %s109
      %s127 = sphi 0, %s127
      %s129 = sphi 0, %s127
      %s130 = sphi 0, %s129
      %s144 = sphi 0, %s130
      %s150 = sphi 0, %s152
      %s153 = sphi 0, %s150
      %s154 = sphi 0, %s153
      %s170 = sphi 0, %s154
    $region4: #{global_att_conv_forward.4} parent=1 // loop_header_branch
      %14 = sbr.rel (%p12) target = $region8
    $region5: #{global_att_conv_forward.4} parent=1 // loop_body
      %s16 = ssub.s32 %s11, 1
      %s17 = ssub.s32 %s11, 2
      %s24 = sadd.s32 1, %s19
      %p25 = scmp.ge.s32.totalorder %s24, 3
      %s26 = scalar_select %p25, 0, %s24
      %s27 = sadd.s32 1, %s18
      %s28 = scalar_select %p25, %s27, %s18
      %p29 = scmp.ge.s32.totalorder %s28, 1
      %s30 = scalar_select %p29, 0, %s28
      %s31 = ssub.s32 %s18, %s30
      %s32 = ssub.s32 %s19, %s26
      %s33 = sor.u32 %s31, %s32
      %p34 = scmp.eq.s32.totalorder %s33, 0
      %s36 = sadd.s32 %s35, 1
      %s37 = scalar_select %p34, %s35, %s36
      %p40 = pneg %p34
      %p41 = scmp.eq.s32.totalorder %s11, 2
      %p42 = por %p40, %p41
      %p43 = scmp.ne.s32.totalorder %s35, %s38
      %p44 = scmp.eq.s32.totalorder %s11, 0
      %p45 = por %p43, %p44
      %p46 = scmp.ne.s32.totalorder %s35, %s38
      %p47 = scmp.eq.s32.totalorder %s16, 2
      %p48 = por %p46, %p47
      %p49 = scmp.ne.s32.totalorder %s38, %s39
      %p50 = scmp.eq.s32.totalorder %s16, 0
      %p51 = por %p49, %p50
      %p52 = scmp.ne.s32.totalorder %s38, %s39
      %p53 = scmp.eq.s32.totalorder %s17, 2
      %p54 = por %p52, %p53
      %p56 = scmp.ne.s32.totalorder %s39, %s55
      %p57 = scmp.eq.s32.totalorder %s17, 0
      %p58 = por %p56, %p57
      %s59 = ssub.s32 %s19, %s26
      %p60 = scmp.eq.s32.totalorder %s59, 0
      %s62 = sadd.s32 %s61, 1
      %s63 = scalar_select %p60, %s61, %s62
      %p66 = pneg %p60
      %p67 = scmp.eq.s32.totalorder %s11, 2
      %p68 = por %p66, %p67
      %p69 = scmp.ne.s32.totalorder %s61, %s64
      %p70 = scmp.eq.s32.totalorder %s11, 0
      %p71 = por %p69, %p70
      %p72 = scmp.ne.s32.totalorder %s61, %s64
      %p73 = scmp.eq.s32.totalorder %s16, 2
      %p74 = por %p72, %p73
      %p75 = scmp.ne.s32.totalorder %s64, %s65
      %p76 = scmp.eq.s32.totalorder %s16, 0
      %p77 = por %p75, %p76
      %p78 = scmp.ne.s32.totalorder %s64, %s65
      %p79 = scmp.eq.s32.totalorder %s17, 2
      %p80 = por %p78, %p79
      %p82 = scmp.ne.s32.totalorder %s65, %s81
      %p83 = scmp.eq.s32.totalorder %s17, 0
      %p84 = por %p82, %p83
      %s86 = sadd.s32 %s85, 1
      %p89 = scmp.eq.s32.totalorder %s11, 2
      %p90 = scmp.ne.s32.totalorder %s85, %s87
      %p91 = scmp.eq.s32.totalorder %s11, 0
      %p92 = por %p90, %p91
      %p93 = scmp.ne.s32.totalorder %s85, %s87
      %p94 = scmp.eq.s32.totalorder %s16, 2
      %p95 = por %p93, %p94
      %p96 = scmp.ne.s32.totalorder %s87, %s88
      %p97 = scmp.eq.s32.totalorder %s16, 0
      %p98 = por %p96, %p97
      %p99 = scmp.ne.s32.totalorder %s87, %s88
      %p100 = scmp.eq.s32.totalorder %s17, 2
      %p101 = por %p99, %p100
      %p103 = scmp.ne.s32.totalorder %s88, %s102
      %p104 = scmp.eq.s32.totalorder %s17, 0
      %p105 = por %p103, %p104
      %s107 = sadd.s32 %s106, 1
      %p110 = scmp.eq.s32.totalorder %s11, 2
      %p111 = scmp.ne.s32.totalorder %s106, %s108
      %p112 = scmp.eq.s32.totalorder %s11, 0
      %p113 = por %p111, %p112
      %p114 = scmp.ne.s32.totalorder %s106, %s108
      %p115 = scmp.eq.s32.totalorder %s16, 2
      %p116 = por %p114, %p115
      %p117 = scmp.ne.s32.totalorder %s108, %s109
      %p118 = scmp.eq.s32.totalorder %s16, 0
      %p119 = por %p117, %p118
      %p120 = scmp.ne.s32.totalorder %s108, %s109
      %p121 = scmp.eq.s32.totalorder %s17, 2
      %p122 = por %p120, %p121
      %p124 = scmp.ne.s32.totalorder %s109, %s123
      %p125 = scmp.eq.s32.totalorder %s17, 0
      %p126 = por %p124, %p125
      %s128 = sadd.s32 %s127, 1
      %p131 = scmp.eq.s32.totalorder %s11, 2
      %p132 = scmp.ne.s32.totalorder %s127, %s129
      %p133 = scmp.eq.s32.totalorder %s11, 0
      %p134 = por %p132, %p133
      %p135 = scmp.ne.s32.totalorder %s127, %s129
      %p136 = scmp.eq.s32.totalorder %s16, 2
      %p137 = por %p135, %p136
      %p138 = scmp.ne.s32.totalorder %s129, %s130
      %p139 = scmp.eq.s32.totalorder %s16, 0
      %p140 = por %p138, %p139
      %p141 = scmp.ne.s32.totalorder %s129, %s130
      %p142 = scmp.eq.s32.totalorder %s17, 2
      %p143 = por %p141, %p142
      %p145 = scmp.ne.s32.totalorder %s130, %s144
      %p146 = scmp.eq.s32.totalorder %s17, 0
      %p147 = por %p145, %p146
      %s148 = ssub.s32 %s18, %s30
      %p149 = scmp.eq.s32.totalorder %s148, 0
      %s151 = sadd.s32 %s150, 1
      %s152 = scalar_select %p149, %s150, %s151
      %p155 = pneg %p149
      %p156 = scmp.eq.s32.totalorder %s11, 2
      %p157 = por %p155, %p156
      %p158 = scmp.ne.s32.totalorder %s150, %s153
      %p159 = scmp.eq.s32.totalorder %s11, 0
      %p160 = por %p158, %p159
      %p161 = scmp.ne.s32.totalorder %s150, %s153
      %p162 = scmp.eq.s32.totalorder %s16, 2
      %p163 = por %p161, %p162
      %p164 = scmp.ne.s32.totalorder %s153, %s154
      %p165 = scmp.eq.s32.totalorder %s16, 0
      %p166 = por %p164, %p165
      %p167 = scmp.ne.s32.totalorder %s153, %s154
      %p168 = scmp.eq.s32.totalorder %s17, 2
      %p169 = por %p167, %p168
      %p171 = scmp.ne.s32.totalorder %s154, %s170
      %p172 = scmp.eq.s32.totalorder %s17, 0
      %p173 = por %p171, %p172
      %p174 = scmp.le.s32.totalorder 1, %s11
      %p175 = scmp.lt.s32.totalorder %s11, 4
      %p176 = pnand %p174, %p175
      %p177 = pneg %p176
      // Predicated region
      $region9: #{global_att_conv_forward.4} parent=5 // pred_check
        _
      $region10: #{global_att_conv_forward.4} parent=5 // pred_check_branch
        %179 = sbr.rel (%p176) target = $region12
      $region11: #{global_att_conv_forward.4} parent=5 // pred_region
        %s180 = ssub.s32 %s11, 1
        // Predicated region
        $region13: #{global_att_conv_forward.4} parent=11 // pred_check
          %p181 = pneg %p98
        $region14: #{global_att_conv_forward.4} parent=11 // pred_check_branch
          %183 = sbr.rel (%p181) target = $region16
        $region15: #{global_att_conv_forward.4} parent=11 // pred_region
          _
        $region16: #{global_att_conv_forward.4} parent=11 // pred_fallthru
          _
        // Predicated region
        $region17: #{global_att_conv_forward.4} parent=11 // pred_check
          %p184 = pneg %p119
        $region18: #{global_att_conv_forward.4} parent=11 // pred_check_branch
          %186 = sbr.rel (%p184) target = $region20
        $region19: #{global_att_conv_forward.4} parent=11 // pred_region
          _
        $region20: #{global_att_conv_forward.4} parent=11 // pred_fallthru
          _
        // Predicated region
        $region21: #{global_att_conv_forward.4} parent=11 // pred_check
          %p187 = pneg %p140
        $region22: #{global_att_conv_forward.4} parent=11 // pred_check_branch
          %189 = sbr.rel (%p187) target = $region24
        $region23: #{global_att_conv_forward.4} parent=11 // pred_region
          _
        $region24: #{global_att_conv_forward.4} parent=11 // pred_fallthru
          _
      $region12: #{global_att_conv_forward.4} parent=5 // pred_fallthru
        _
      %p190 = scmp.lt.s32.totalorder %s11, 3
      // Predicated region
      $region25: #{global_att_conv_forward.4} parent=5 // pred_check
        %p191 = pneg %p190
      $region26: #{global_att_conv_forward.4} parent=5 // pred_check_branch
        %193 = sbr.rel (%p191) target = $region28
      $region27: #{global_att_conv_forward.4} parent=5 // pred_region
        // Predicated region
        $region29: #{global_att_conv_forward.4} parent=27 // pred_check
          %p194 = pneg %p45
        $region30: #{global_att_conv_forward.4} parent=27 // pred_check_branch
          %196 = sbr.rel (%p194) target = $region32
        $region31: #{global_att_conv_forward.4} parent=27 // pred_region
          %s197 = sand.u32 %s35, 1
          %s198 = sand.u32 %s35, 1
          %s199 = smul.addr %s198, 64
          %s200 = scalar_lea.vmem [#allocation3], %s199
          %s201 = smul.u32 4, %s18
          %s202 = smul.u32 4, %s19
          %s203 = smul.addr %s201, 12
          %s204 = sadd.s32 %s202, %s203
          %s205 = smul.addr %s204, 4
          %s206 = scalar_lea.vmem %s0, %s205
          // Predicated region
          $region33: #{global_att_conv_forward.4} parent=31 // pred_check
            _
          $region34: #{global_att_conv_forward.4} parent=31 // pred_check_branch
            %208 = sbr.rel (0) target = $region36
          $region35: #{global_att_conv_forward.4} parent=31 // pred_region
            // Predicated region
            $region37: #{global_att_conv_forward.4} parent=35 // pred_check
              _
            $region38: #{global_att_conv_forward.4} parent=35 // pred_check_branch
              %210 = sbr.rel (0) target = $region40
            $region39: #{global_att_conv_forward.4} parent=35 // pred_region
              loop: start=0, step=1, limit=1
              $region41: #{global_att_conv_forward.4} parent=39 // loop_pre_header
                _
              $region42: #{global_att_conv_forward.4} parent=39 // loop_header
                %s212 = sphi 0, %s216
                %p213 = scmp.ge.s32.totalorder %s212, 1
                %s217 = sphi %s206, %s206
                %s218 = sphi %s200, %s200
              $region43: #{global_att_conv_forward.4} parent=39 // loop_header_branch
                %215 = sbr.rel (%p213) target = $region47
              $region44: #{global_att_conv_forward.4} parent=39 // loop_body
                %v219 = vld [vmem:[%s217] sm:$0xff]
                %220 = vst [vmem:[%s218] sm:$0xff] %v219
                %v221 = vld [vmem:[%s217 + $0x8] sm:$0xff]
                %222 = vst [vmem:[%s218 + $0x8] sm:$0xff] %v221
                %v223 = vld [vmem:[%s217 + $0x30] sm:$0xff]
                %224 = vst [vmem:[%s218 + $0x10] sm:$0xff] %v223
                %v225 = vld [vmem:[%s217 + $0x38] sm:$0xff]
                %226 = vst [vmem:[%s218 + $0x18] sm:$0xff] %v225
                %v227 = vld [vmem:[%s217 + $0x60] sm:$0xff]
                %228 = vst [vmem:[%s218 + $0x20] sm:$0xff] %v227
                %v229 = vld [vmem:[%s217 + $0x68] sm:$0xff]
                %230 = vst [vmem:[%s218 + $0x28] sm:$0xff] %v229
                %v231 = vld [vmem:[%s217 + $0x90] sm:$0xff]
                %232 = vst [vmem:[%s218 + $0x30] sm:$0xff] %v231
                %v233 = vld [vmem:[%s217 + $0x98] sm:$0xff]
                %234 = vst [vmem:[%s218 + $0x38] sm:$0xff] %v233
              $region45: #{global_att_conv_forward.4} parent=39 // loop_footer
                %s216 = sadd.s32 1, %s212
              $region46: #{global_att_conv_forward.4} parent=39 // loop_footer_branch
                %211 = sbr.rel target = $region42
              $region47: #{global_att_conv_forward.4} parent=39 // loop_exit
                _
            $region40: #{global_att_conv_forward.4} parent=35 // pred_fallthru
              _
            // Predicated region
            $region48: #{global_att_conv_forward.4} parent=35 // pred_check
              _
            $region49: #{global_att_conv_forward.4} parent=35 // pred_check_branch
              %236 = sbr.rel target = $region51
            $region50: #{global_att_conv_forward.4} parent=35 // pred_region
              _
            $region51: #{global_att_conv_forward.4} parent=35 // pred_fallthru
              _
          $region36: #{global_att_conv_forward.4} parent=31 // pred_fallthru
            _
          %237 = vnop
        $region32: #{global_att_conv_forward.4} parent=27 // pred_fallthru
          _
        // Predicated region
        $region52: #{global_att_conv_forward.4} parent=27 // pred_check
          %p238 = pneg %p71
        $region53: #{global_att_conv_forward.4} parent=27 // pred_check_branch
          %240 = sbr.rel (%p238) target = $region55
        $region54: #{global_att_conv_forward.4} parent=27 // pred_region
          %s241 = smul.u32 64, %s19
          %p242 = scmp.lt.s32.totalorder %s241, 191
          %s243 = scalar_select %p242, %s241, 191
          %s244 = smul.addr %s243, 4
          %s245 = scalar_lea.vmem %s1, %s244
          %s246 = smul.u32 64, %s19
        $region55: #{global_att_conv_forward.4} parent=27 // pred_fallthru
          _
      $region28: #{global_att_conv_forward.4} parent=5 // pred_fallthru
        _
      %p247 = scmp.le.s32.totalorder 1, %s11
      %p248 = scmp.lt.s32.totalorder %s11, 4
      %p249 = pnand %p247, %p248
      %p250 = pneg %p249
      // Predicated region
      $region56: #{global_att_conv_forward.4} parent=5 // pred_check
        _
      $region57: #{global_att_conv_forward.4} parent=5 // pred_check_branch
        %252 = sbr.rel (%p249) target = $region59
      $region58: #{global_att_conv_forward.4} parent=5 // pred_region
        %s253 = ssub.s32 %s11, 1
        %s254 = sand.u32 %s38, 1
        %s255 = sand.u32 %s38, 1
        %s256 = smul.addr %s255, 64
        %s257 = scalar_lea.vmem [#allocation3], %s256
        // Predicated region
        $region60: #{global_att_conv_forward.4} parent=58 // pred_check
          %p258 = pneg %p51
        $region61: #{global_att_conv_forward.4} parent=58 // pred_check_branch
          %260 = sbr.rel (%p258) target = $region63
        $region62: #{global_att_conv_forward.4} parent=58 // pred_region
          _
        $region63: #{global_att_conv_forward.4} parent=58 // pred_fallthru
          _
        %s261 = sand.u32 %s38, 1
        %s262 = sand.u32 %s38, 1
        %s263 = smul.addr %s262, 64
        %s264 = scalar_lea.vmem [#allocation3], %s263
        %p265 = pneg %p51
        %p266 = pneg %p48
        %s267 = smul.u32 64, %s21
        %p268 = scmp.lt.s32.totalorder %s267, 191
        %s269 = scalar_select %p268, %s267, 191
        %s270 = smul.addr %s269, 4
        %s271 = scalar_lea.vmem %s1, %s270
        %p272 = pneg %p77
        %p273 = pneg %p74
        %p274 = pneg %p98
        %p275 = pneg %p95
        %p276 = pneg %p119
        %p277 = pneg %p116
        %p278 = pneg %p140
        %p279 = pneg %p137
        %p280 = pneg %p166
        %p281 = pneg %p163
        %s282 = smul.u32 4, %s20
        %p283 = scmp.lt.s32.totalorder %s282, 3
        %s284 = scalar_select %p283, %s282, 3
        %s285 = smul.addr %s284, 8
        %s286 = scalar_lea.vmem %s5, %s285
        %s287 = smul.u32 4, %s20
        %s288 = smul.u32 4, %s21
        %s289 = smul.u32 64, %s21
        %p290 = scmp.lt.s32.totalorder %s289, 191
        %s291 = scalar_select %p290, %s289, 191
        %s292 = smul.addr %s291, 4
        %s293 = scalar_lea.vmem %s1, %s292
        %s294 = smul.u32 64, %s21
        %s295 = smul.u32 4, %s20
        %p296 = scmp.lt.s32.totalorder %s295, 3
        %s297 = scalar_select %p296, %s295, 3
        %s298 = smul.addr %s297, 8
        %s299 = scalar_lea.vmem %s5, %s298
        %s300 = smul.u32 4, %s20
        %p301 = scmp.eq.s32.totalorder %s21, 0
        // Predicated region
        $region64: #{global_att_conv_forward.4} parent=58 // pred_check
          %p302 = pneg %p301
        $region65: #{global_att_conv_forward.4} parent=58 // pred_check_branch
          %304 = sbr.rel (%p302) target = $region67
        $region66: #{global_att_conv_forward.4} parent=58 // pred_region
          %305 = vst [vmem:[#allocation2] sm:$0xff] 0.0
          %306 = vst [vmem:[#allocation2 + $0x8] sm:$0xff] 0.0
          %307 = vst [vmem:[#allocation2 + $0x10] sm:$0xff] 0.0
          %308 = vst [vmem:[#allocation2 + $0x18] sm:$0xff] 0.0
        $region67: #{global_att_conv_forward.4} parent=58 // pred_fallthru
          _
        %v309 = vld [vmem:[#allocation2] sm:$0xff]
        %v310 = vld [vmem:[#allocation2 + $0x8] sm:$0xff]
        %v311 = vld [vmem:[#allocation2 + $0x10] sm:$0xff]
        %v312 = vld [vmem:[#allocation2 + $0x18] sm:$0xff]
        %v313 = vld [vmem:[%s257] sm:$0xff]
        %v314 = vld [vmem:[%s257 + $0x8] sm:$0xff]
        %v315 = vld [vmem:[%s257 + $0x10] sm:$0xff]
        %v316 = vld [vmem:[%s257 + $0x18] sm:$0xff]
        %v317 = vld [vmem:[%s257 + $0x20] sm:$0xff]
        %v318 = vld [vmem:[%s257 + $0x28] sm:$0xff]
        %v319 = vld [vmem:[%s257 + $0x30] sm:$0xff]
        %v320 = vld [vmem:[%s257 + $0x38] sm:$0xff]
        %v321 = vld [vmem:[%s293] sm:$0xf]
        %v322 = vld [vmem:[%s293 + $0x4] sm:$0xf]
        %v323 = vld [vmem:[%s293 + $0x8] sm:$0xf]
        %v324 = vld [vmem:[%s293 + $0xc] sm:$0xf]
        %v325 = vld [vmem:[%s293 + $0x10] sm:$0xf]
        %v326 = vld [vmem:[%s293 + $0x14] sm:$0xf]
        %v327 = vld [vmem:[%s293 + $0x18] sm:$0xf]
        %v328 = vld [vmem:[%s293 + $0x1c] sm:$0xf]
        %v329 = vld [vmem:[%s293 + $0x20] sm:$0xf]
        %v330 = vld [vmem:[%s293 + $0x24] sm:$0xf]
        %v331 = vld [vmem:[%s293 + $0x28] sm:$0xf]
        %v332 = vld [vmem:[%s293 + $0x2c] sm:$0xf]
        %v333 = vld [vmem:[%s293 + $0x30] sm:$0xf]
        %v334 = vld [vmem:[%s293 + $0x34] sm:$0xf]
        %v335 = vld [vmem:[%s293 + $0x38] sm:$0xf]
        %v336 = vld [vmem:[%s293 + $0x3c] sm:$0xf]
        %v337 = vld [vmem:[%s293 + $0x40] sm:$0xf]
        %v338 = vld [vmem:[%s293 + $0x44] sm:$0xf]
        %v339 = vld [vmem:[%s293 + $0x48] sm:$0xf]
        %v340 = vld [vmem:[%s293 + $0x4c] sm:$0xf]
        %v341 = vld [vmem:[%s293 + $0x50] sm:$0xf]
        %v342 = vld [vmem:[%s293 + $0x54] sm:$0xf]
        %v343 = vld [vmem:[%s293 + $0x58] sm:$0xf]
        %v344 = vld [vmem:[%s293 + $0x5c] sm:$0xf]
        %v345 = vld [vmem:[%s293 + $0x60] sm:$0xf]
        %v346 = vld [vmem:[%s293 + $0x64] sm:$0xf]
        %v347 = vld [vmem:[%s293 + $0x68] sm:$0xf]
        %v348 = vld [vmem:[%s293 + $0x6c] sm:$0xf]
        %v349 = vld [vmem:[%s293 + $0x70] sm:$0xf]
        %v350 = vld [vmem:[%s293 + $0x74] sm:$0xf]
        %v351 = vld [vmem:[%s293 + $0x78] sm:$0xf]
        %v352 = vld [vmem:[%s293 + $0x7c] sm:$0xf]
        %v353 = vld [vmem:[%s293 + $0x80] sm:$0xf]
        %v354 = vld [vmem:[%s293 + $0x84] sm:$0xf]
        %v355 = vld [vmem:[%s293 + $0x88] sm:$0xf]
        %v356 = vld [vmem:[%s293 + $0x8c] sm:$0xf]
        %v357 = vld [vmem:[%s293 + $0x90] sm:$0xf]
        %v358 = vld [vmem:[%s293 + $0x94] sm:$0xf]
        %v359 = vld [vmem:[%s293 + $0x98] sm:$0xf]
        %v360 = vld [vmem:[%s293 + $0x9c] sm:$0xf]
        %v361 = vld [vmem:[%s293 + $0xa0] sm:$0xf]
        %v362 = vld [vmem:[%s293 + $0xa4] sm:$0xf]
        %v363 = vld [vmem:[%s293 + $0xa8] sm:$0xf]
        %v364 = vld [vmem:[%s293 + $0xac] sm:$0xf]
        %v365 = vld [vmem:[%s293 + $0xb0] sm:$0xf]
        %v366 = vld [vmem:[%s293 + $0xb4] sm:$0xf]
        %v367 = vld [vmem:[%s293 + $0xb8] sm:$0xf]
        %v368 = vld [vmem:[%s293 + $0xbc] sm:$0xf]
        %v369 = vld [vmem:[%s293 + $0xc0] sm:$0xf]
        %v370 = vld [vmem:[%s293 + $0xc4] sm:$0xf]
        %v371 = vld [vmem:[%s293 + $0xc8] sm:$0xf]
        %v372 = vld [vmem:[%s293 + $0xcc] sm:$0xf]
        %v373 = vld [vmem:[%s293 + $0xd0] sm:$0xf]
        %v374 = vld [vmem:[%s293 + $0xd4] sm:$0xf]
        %v375 = vld [vmem:[%s293 + $0xd8] sm:$0xf]
        %v376 = vld [vmem:[%s293 + $0xdc] sm:$0xf]
        %v377 = vld [vmem:[%s293 + $0xe0] sm:$0xf]
        %v378 = vld [vmem:[%s293 + $0xe4] sm:$0xf]
        %v379 = vld [vmem:[%s293 + $0xe8] sm:$0xf]
        %v380 = vld [vmem:[%s293 + $0xec] sm:$0xf]
        %v381 = vld [vmem:[%s293 + $0xf0] sm:$0xf]
        %v382 = vld [vmem:[%s293 + $0xf4] sm:$0xf]
        %v383 = vld [vmem:[%s293 + $0xf8] sm:$0xf]
        %v384 = vld [vmem:[%s293 + $0xfc] sm:$0xf]
        %v393 = vunpack.c.l.b16 %v313
        %v394 = vunpack.c.h.b16 %v313
        %v395 = vunpack.c.l.b16 %v314
        %v396 = vunpack.c.h.b16 %v314
        %v397 = vunpack.c.l.b16 %v315
        %v398 = vunpack.c.h.b16 %v315
        %v399 = vunpack.c.l.b16 %v316
        %v400 = vunpack.c.h.b16 %v316
        %v401 = vunpack.c.l.b16 %v317
        %v402 = vunpack.c.h.b16 %v317
        %v403 = vunpack.c.l.b16 %v318
        %v404 = vunpack.c.h.b16 %v318
        %v405 = vunpack.c.l.b16 %v319
        %v406 = vunpack.c.h.b16 %v319
        %v407 = vunpack.c.l.b16 %v320
        %v408 = vunpack.c.h.b16 %v320
        %v409 = vpack.c.b16 %v397, %v393
        %v410 = vpack.c.b16 %v398, %v394
        %v411 = vpack.c.b16 %v399, %v395
        %v412 = vpack.c.b16 %v400, %v396
        %v413 = vpack.c.b16 %v405, %v401
        %v414 = vpack.c.b16 %v406, %v402
        %v415 = vpack.c.b16 %v407, %v403
        %v416 = vpack.c.b16 %v408, %v404
        %v489 = vunpack.c.l.b16 %v321
        %v490 = vunpack.c.l.b16 %v322
        %v491 = vunpack.c.l.b16 %v323
        %v492 = vunpack.c.l.b16 %v324
        %v493 = vunpack.c.l.b16 %v325
        %v494 = vunpack.c.l.b16 %v326
        %v495 = vunpack.c.l.b16 %v327
        %v496 = vunpack.c.l.b16 %v328
        %v497 = vunpack.c.l.b16 %v329
        %v498 = vunpack.c.l.b16 %v330
        %v499 = vunpack.c.l.b16 %v331
        %v500 = vunpack.c.l.b16 %v332
        %v501 = vunpack.c.l.b16 %v333
        %v502 = vunpack.c.l.b16 %v334
        %v503 = vunpack.c.l.b16 %v335
        %v504 = vunpack.c.l.b16 %v336
        %v505 = vunpack.c.l.b16 %v337
        %v506 = vunpack.c.l.b16 %v338
        %v507 = vunpack.c.l.b16 %v339
        %v508 = vunpack.c.l.b16 %v340
        %v509 = vunpack.c.l.b16 %v341
        %v510 = vunpack.c.l.b16 %v342
        %v511 = vunpack.c.l.b16 %v343
        %v512 = vunpack.c.l.b16 %v344
        %v513 = vunpack.c.l.b16 %v345
        %v514 = vunpack.c.l.b16 %v346
        %v515 = vunpack.c.l.b16 %v347
        %v516 = vunpack.c.l.b16 %v348
        %v517 = vunpack.c.l.b16 %v349
        %v518 = vunpack.c.l.b16 %v350
        %v519 = vunpack.c.l.b16 %v351
        %v520 = vunpack.c.l.b16 %v352
        %v521 = vunpack.c.l.b16 %v353
        %v522 = vunpack.c.l.b16 %v354
        %v523 = vunpack.c.l.b16 %v355
        %v524 = vunpack.c.l.b16 %v356
        %v525 = vunpack.c.l.b16 %v357
        %v526 = vunpack.c.l.b16 %v358
        %v527 = vunpack.c.l.b16 %v359
        %v528 = vunpack.c.l.b16 %v360
        %v529 = vunpack.c.l.b16 %v361
        %v530 = vunpack.c.l.b16 %v362
        %v531 = vunpack.c.l.b16 %v363
        %v532 = vunpack.c.l.b16 %v364
        %v533 = vunpack.c.l.b16 %v365
        %v534 = vunpack.c.l.b16 %v366
        %v535 = vunpack.c.l.b16 %v367
        %v536 = vunpack.c.l.b16 %v368
        %v537 = vunpack.c.l.b16 %v369
        %v538 = vunpack.c.l.b16 %v370
        %v539 = vunpack.c.l.b16 %v371
        %v540 = vunpack.c.l.b16 %v372
        %v541 = vunpack.c.l.b16 %v373
        %v542 = vunpack.c.l.b16 %v374
        %v543 = vunpack.c.l.b16 %v375
        %v544 = vunpack.c.l.b16 %v376
        %v545 = vunpack.c.l.b16 %v377
        %v546 = vunpack.c.l.b16 %v378
        %v547 = vunpack.c.l.b16 %v379
        %v548 = vunpack.c.l.b16 %v380
        %v549 = vunpack.c.l.b16 %v381
        %v550 = vunpack.c.l.b16 %v382
        %v551 = vunpack.c.l.b16 %v383
        %v552 = vunpack.c.l.b16 %v384
        %v553 = vpack.c.b16 %v490, %v489
        %v554 = vpack.c.b16 %v492, %v491
        %v555 = vpack.c.b16 %v494, %v493
        %v556 = vpack.c.b16 %v496, %v495
        %v557 = vpack.c.b16 %v498, %v497
        %v558 = vpack.c.b16 %v500, %v499
        %v559 = vpack.c.b16 %v502, %v501
        %v560 = vpack.c.b16 %v504, %v503
        %v561 = vpack.c.b16 %v506, %v505
        %v562 = vpack.c.b16 %v508, %v507
        %v563 = vpack.c.b16 %v510, %v509
        %v564 = vpack.c.b16 %v512, %v511
        %v565 = vpack.c.b16 %v514, %v513
        %v566 = vpack.c.b16 %v516, %v515
        %v567 = vpack.c.b16 %v518, %v517
        %v568 = vpack.c.b16 %v520, %v519
        %v569 = vpack.c.b16 %v522, %v521
        %v570 = vpack.c.b16 %v524, %v523
        %v571 = vpack.c.b16 %v526, %v525
        %v572 = vpack.c.b16 %v528, %v527
        %v573 = vpack.c.b16 %v530, %v529
        %v574 = vpack.c.b16 %v532, %v531
        %v575 = vpack.c.b16 %v534, %v533
        %v576 = vpack.c.b16 %v536, %v535
        %v577 = vpack.c.b16 %v538, %v537
        %v578 = vpack.c.b16 %v540, %v539
        %v579 = vpack.c.b16 %v542, %v541
        %v580 = vpack.c.b16 %v544, %v543
        %v581 = vpack.c.b16 %v546, %v545
        %v582 = vpack.c.b16 %v548, %v547
        %v583 = vpack.c.b16 %v550, %v549
        %v584 = vpack.c.b16 %v552, %v551
        %617 = vmatpush.bf16.msra.mxu0 %v560
        %618 = vmatpush.bf16.msra.mxu0 %v559
        %619 = vmatpush.bf16.msra.mxu0 %v558
        %620 = vmatpush.bf16.msra.mxu0 %v557
        %621 = vmatpush.bf16.msra.mxu0 %v556
        %622 = vmatpush.bf16.msra.mxu0 %v555
        %623 = vmatpush.bf16.msra.mxu0 %v554
        %624 = vmatpush.bf16.msra.mxu0 %v553
        %625 = vmatmul.bf16.gmra.mxu0 %v409
        %v626 = vpop.f32.mrf.mxu0
        %v627 = vadd.f32 0.0, %v626
        %v628 = vpop.f32.mrf.mxu0
        %v629 = vadd.f32 0.0, %v628
        %630 = vmatmul.bf16.gmra.mxu0 %v413
        %v631 = vpop.f32.mrf.mxu0
        %v632 = vadd.f32 0.0, %v631
        %v633 = vpop.f32.mrf.mxu0
        %v634 = vadd.f32 0.0, %v633
        %635 = vdwg.mxu0
        %636 = vmatpush.bf16.msra.mxu0 %v568
        %637 = vmatpush.bf16.msra.mxu0 %v567
        %638 = vmatpush.bf16.msra.mxu0 %v566
        %639 = vmatpush.bf16.msra.mxu0 %v565
        %640 = vmatpush.bf16.msra.mxu0 %v564
        %641 = vmatpush.bf16.msra.mxu0 %v563
        %642 = vmatpush.bf16.msra.mxu0 %v562
        %643 = vmatpush.bf16.msra.mxu0 %v561
        %644 = vmatmul.bf16.gmra.mxu0 %v410
        %v645 = vpop.f32.mrf.mxu0
        %v646 = vadd.f32 %v627, %v645
        %v647 = vpop.f32.mrf.mxu0
        %v648 = vadd.f32 %v629, %v647
        %649 = vmatmul.bf16.gmra.mxu0 %v414
        %v650 = vpop.f32.mrf.mxu0
        %v651 = vadd.f32 %v632, %v650
        %v652 = vpop.f32.mrf.mxu0
        %v653 = vadd.f32 %v634, %v652
        %654 = vdwg.mxu0
        %655 = vmatpush.bf16.msra.mxu0 %v576
        %656 = vmatpush.bf16.msra.mxu0 %v575
        %657 = vmatpush.bf16.msra.mxu0 %v574
        %658 = vmatpush.bf16.msra.mxu0 %v573
        %659 = vmatpush.bf16.msra.mxu0 %v572
        %660 = vmatpush.bf16.msra.mxu0 %v571
        %661 = vmatpush.bf16.msra.mxu0 %v570
        %662 = vmatpush.bf16.msra.mxu0 %v569
        %663 = vmatmul.bf16.gmra.mxu0 %v411
        %v664 = vpop.f32.mrf.mxu0
        %v665 = vadd.f32 %v646, %v664
        %v666 = vpop.f32.mrf.mxu0
        %v667 = vadd.f32 %v648, %v666
        %668 = vmatmul.bf16.gmra.mxu0 %v415
        %v669 = vpop.f32.mrf.mxu0
        %v670 = vadd.f32 %v651, %v669
        %v671 = vpop.f32.mrf.mxu0
        %v672 = vadd.f32 %v653, %v671
        %673 = vdwg.mxu0
        %674 = vmatpush.bf16.msra.mxu0 %v584
        %675 = vmatpush.bf16.msra.mxu0 %v583
        %676 = vmatpush.bf16.msra.mxu0 %v582
        %677 = vmatpush.bf16.msra.mxu0 %v581
        %678 = vmatpush.bf16.msra.mxu0 %v580
        %679 = vmatpush.bf16.msra.mxu0 %v579
        %680 = vmatpush.bf16.msra.mxu0 %v578
        %681 = vmatpush.bf16.msra.mxu0 %v577
        %682 = vmatmul.bf16.gmra.mxu0 %v412
        %v683 = vpop.f32.mrf.mxu0
        %v684 = vadd.f32 %v665, %v683
        %v685 = vpop.f32.mrf.mxu0
        %v686 = vadd.f32 %v667, %v685
        %687 = vmatmul.bf16.gmra.mxu0 %v416
        %v688 = vpop.f32.mrf.mxu0
        %v689 = vadd.f32 %v670, %v688
        %v690 = vpop.f32.mrf.mxu0
        %v691 = vadd.f32 %v672, %v690
        %692 = vdwg.mxu0
        %v693 = vadd.f32 %v309, %v684
        %v694 = vadd.f32 %v310, %v686
        %v695 = vadd.f32 %v311, %v689
        %v696 = vadd.f32 %v312, %v691
        %697 = vst [vmem:[#allocation2] sm:$0xff] %v693
        %698 = vst [vmem:[#allocation2 + $0x8] sm:$0xff] %v694
        %699 = vst [vmem:[#allocation2 + $0x10] sm:$0xff] %v695
        %700 = vst [vmem:[#allocation2 + $0x18] sm:$0xff] %v696
        %p701 = scmp.eq.s32.totalorder %s21, 2
        // Predicated region
        $region68: #{global_att_conv_forward.4} parent=58 // pred_check
          %p702 = pneg %p701
        $region69: #{global_att_conv_forward.4} parent=58 // pred_check_branch
          %704 = sbr.rel (%p702) target = $region71
        $region70: #{global_att_conv_forward.4} parent=58 // pred_region
          %v705 = vld [vmem:[#allocation2] sm:$0xff]
          %v706 = vld [vmem:[#allocation2 + $0x8] sm:$0xff]
          %v707 = vld [vmem:[#allocation2 + $0x10] sm:$0xff]
          %v708 = vld [vmem:[#allocation2 + $0x18] sm:$0xff]
          %v709 = vld [vmem:[%s2] sm:$0x1]
          %v711 = vperm.slane %v709, 0
          %v713 = vmul.f32 %v705, %v711
          %v714 = vmul.f32 %v706, %v711
          %v715 = vmul.f32 %v707, %v711
          %v716 = vmul.f32 %v708, %v711
          %v717 = vld [vmem:[%s3] sm:$0x1]
          %v719 = vperm.slane %v717, 0
          %v721 = vadd.f32 %v713, %v719
          %v722 = vadd.f32 %v714, %v719
          %v723 = vadd.f32 %v715, %v719
          %v724 = vadd.f32 %v716, %v719
          %v725 = vmax.f32 %v721, 0.0
          %v726 = vmax.f32 %v722, 0.0
          %v727 = vmax.f32 %v723, 0.0
          %v728 = vmax.f32 %v724, 0.0
          %v729 = vpack.c.bf16 %v726, %v725
          %v730 = vpack.c.bf16 %v728, %v727
          %v731 = vld [vmem:[%s4] sm:$0xf]
          %v732 = vld [vmem:[%s4 + $0x4] sm:$0xf]
          %v733 = vld [vmem:[%s4 + $0x8] sm:$0xf]
          %v734 = vld [vmem:[%s4 + $0xc] sm:$0xf]
          %v735 = vld [vmem:[%s4 + $0x10] sm:$0xf]
          %v736 = vld [vmem:[%s4 + $0x14] sm:$0xf]
          %v737 = vld [vmem:[%s4 + $0x18] sm:$0xf]
          %v738 = vld [vmem:[%s4 + $0x1c] sm:$0xf]
          %v739 = vld [vmem:[%s4 + $0x20] sm:$0xf]
          %v740 = vld [vmem:[%s4 + $0x24] sm:$0xf]
          %v741 = vld [vmem:[%s4 + $0x28] sm:$0xf]
          %v742 = vld [vmem:[%s4 + $0x2c] sm:$0xf]
          %v743 = vld [vmem:[%s4 + $0x30] sm:$0xf]
          %v744 = vld [vmem:[%s4 + $0x34] sm:$0xf]
          %v745 = vld [vmem:[%s4 + $0x38] sm:$0xf]
          %v746 = vld [vmem:[%s4 + $0x3c] sm:$0xf]
          %v763 = vunpack.c.l.b16 %v731
          %v764 = vunpack.c.l.b16 %v732
          %v765 = vunpack.c.l.b16 %v733
          %v766 = vunpack.c.l.b16 %v734
          %v767 = vunpack.c.l.b16 %v735
          %v768 = vunpack.c.l.b16 %v736
          %v769 = vunpack.c.l.b16 %v737
          %v770 = vunpack.c.l.b16 %v738
          %v771 = vunpack.c.l.b16 %v739
          %v772 = vunpack.c.l.b16 %v740
          %v773 = vunpack.c.l.b16 %v741
          %v774 = vunpack.c.l.b16 %v742
          %v775 = vunpack.c.l.b16 %v743
          %v776 = vunpack.c.l.b16 %v744
          %v777 = vunpack.c.l.b16 %v745
          %v778 = vunpack.c.l.b16 %v746
          %v779 = vpack.c.b16 %v764, %v763
          %v780 = vpack.c.b16 %v766, %v765
          %v781 = vpack.c.b16 %v768, %v767
          %v782 = vpack.c.b16 %v770, %v769
          %v783 = vpack.c.b16 %v772, %v771
          %v784 = vpack.c.b16 %v774, %v773
          %v785 = vpack.c.b16 %v776, %v775
          %v786 = vpack.c.b16 %v778, %v777
          %795 = vmatpush.bf16.msra.mxu0 %v786
          %796 = vmatpush.bf16.msra.mxu0 %v785
          %797 = vmatpush.bf16.msra.mxu0 %v784
          %798 = vmatpush.bf16.msra.mxu0 %v783
          %799 = vmatpush.bf16.msra.mxu0 %v782
          %800 = vmatpush.bf16.msra.mxu0 %v781
          %801 = vmatpush.bf16.msra.mxu0 %v780
          %802 = vmatpush.bf16.msra.mxu0 %v779
          %803 = vmatmul.bf16.gmra.mxu0 %v729
          %v804 = vpop.f32.mrf.mxu0
          %v805 = vadd.f32 0.0, %v804
          %v806 = vpop.f32.mrf.mxu0
          %v807 = vadd.f32 0.0, %v806
          %808 = vmatmul.bf16.gmra.mxu0 %v730
          %v809 = vpop.f32.mrf.mxu0
          %v810 = vadd.f32 0.0, %v809
          %v811 = vpop.f32.mrf.mxu0
          %v812 = vadd.f32 0.0, %v811
          %813 = vdwg.mxu0
          %v814 = vlaneseq
          %v815 = vand.u32 %v814, 127
          %vm816 = vcmp.lt.s32.totalorder %v815, 4
          %v817 = vsel %vm816, %v805, -1e+30
          %v818 = vsel %vm816, %v807, -1e+30
          %v819 = vsel %vm816, %v810, -1e+30
          %v820 = vsel %vm816, %v812, -1e+30
          %821 = vmax.xlane.f32.xlu0 %v817
          %v822 = vpop.xlane.xlu0 %821
          %823 = vmax.xlane.f32.xlu0 %v818
          %v824 = vpop.xlane.xlu0 %823
          %825 = vmax.xlane.f32.xlu0 %v819
          %v826 = vpop.xlane.xlu0 %825
          %827 = vmax.xlane.f32.xlu0 %v820
          %v828 = vpop.xlane.xlu0 %827
          %v829 = vsub.f32 %v817, %v822
          %v830 = vsub.f32 %v818, %v824
          %v831 = vsub.f32 %v819, %v826
          %v832 = vsub.f32 %v820, %v828
          %v833 = vmul.f32 %v829, 1.442695
          %v834 = vpow.pop %v833
          %v835 = vmul.f32 %v830, 1.442695
          %v836 = vpow.pop %v835
          %v837 = vmul.f32 %v831, 1.442695
          %v838 = vpow.pop %v837
          %v839 = vmul.f32 %v832, 1.442695
          %v840 = vpow.pop %v839
          %841 = vadd.xlane.f32.xlu0 %v834
          %v842 = vpop.xlane.xlu0 %841
          %843 = vadd.xlane.f32.xlu0 %v836
          %v844 = vpop.xlane.xlu0 %843
          %845 = vadd.xlane.f32.xlu0 %v838
          %v846 = vpop.xlane.xlu0 %845
          %847 = vadd.xlane.f32.xlu0 %v840
          %v848 = vpop.xlane.xlu0 %847
          %v849 = vrcp.pop %v842
          %v850 = vrcp.pop %v844
          %v851 = vrcp.pop %v846
          %v852 = vrcp.pop %v848
          %v853 = vmul.f32 %v842, %v849
          %v854 = vmul.f32 %v844, %v850
          %v855 = vmul.f32 %v846, %v851
          %v856 = vmul.f32 %v848, %v852
          %v857 = vsub.f32 2.0, %v853
          %v858 = vsub.f32 2.0, %v854
          %v859 = vsub.f32 2.0, %v855
          %v860 = vsub.f32 2.0, %v856
          %v861 = vmul.f32 %v849, %v857
          %v862 = vmul.f32 %v850, %v858
          %v863 = vmul.f32 %v851, %v859
          %v864 = vmul.f32 %v852, %v860
          %v865 = vmul.f32 %v834, %v861
          %v866 = vmul.f32 %v836, %v862
          %v867 = vmul.f32 %v838, %v863
          %v868 = vmul.f32 %v840, %v864
          %869 = vst [vmem:[%s299] sm:$0xff] %v865
          %870 = vst [vmem:[%s299 + $0x8] sm:$0xff] %v866
          %871 = vst [vmem:[%s299 + $0x10] sm:$0xff] %v867
          %872 = vst [vmem:[%s299 + $0x18] sm:$0xff] %v868
        $region71: #{global_att_conv_forward.4} parent=58 // pred_fallthru
          _
        %s873 = smul.u32 4, %s20
        %p874 = scmp.lt.s32.totalorder %s873, 3
        %s875 = scalar_select %p874, %s873, 3
        %s876 = smul.addr %s875, 8
        %s877 = scalar_lea.vmem %s5, %s876
        // Predicated region
        $region72: #{global_att_conv_forward.4} parent=58 // pred_check
          %p878 = pneg %p163
        $region73: #{global_att_conv_forward.4} parent=58 // pred_check_branch
          %880 = sbr.rel (%p878) target = $region75
        $region74: #{global_att_conv_forward.4} parent=58 // pred_region
          %s881 = smul.u32 4, %s20
        $region75: #{global_att_conv_forward.4} parent=58 // pred_fallthru
          _
        // Predicated region
        $region76: #{global_att_conv_forward.4} parent=58 // pred_check
          %p882 = pneg %p163
        $region77: #{global_att_conv_forward.4} parent=58 // pred_check_branch
          %884 = sbr.rel (%p882) target = $region79
        $region78: #{global_att_conv_forward.4} parent=58 // pred_region
          %s885 = smul.u32 4, %s20
          %p886 = scmp.lt.s32.totalorder %s885, 3
          %s887 = scalar_select %p886, %s885, 3
          %s888 = smul.addr %s887, 8
          %s889 = scalar_lea.vmem %s5, %s888
        $region79: #{global_att_conv_forward.4} parent=58 // pred_fallthru
          _
      $region59: #{global_att_conv_forward.4} parent=5 // pred_fallthru
        _
      %p890 = scmp.le.s32.totalorder 2, %s11
      // Predicated region
      $region80: #{global_att_conv_forward.4} parent=5 // pred_check
        %p891 = pneg %p890
      $region81: #{global_att_conv_forward.4} parent=5 // pred_check_branch
        %893 = sbr.rel (%p891) target = $region83
      $region82: #{global_att_conv_forward.4} parent=5 // pred_region
        %s894 = ssub.s32 %s11, 2
      $region83: #{global_att_conv_forward.4} parent=5 // pred_fallthru
        _
    $region6: #{global_att_conv_forward.4} parent=1 // loop_footer
      %s15 = sadd.s32 1, %s11
    $region7: #{global_att_conv_forward.4} parent=1 // loop_footer_branch
      %10 = sbr.rel target = $region3
    $region8: #{global_att_conv_forward.4} parent=1 // loop_exit
      _

</llo_original>
